<compile_context>
chip_gen: v7x
topology: tpu7x:2x2x1
jax: 0.10.0
libtpu: 0.0.40
codegen_flags: <defaults>
</compile_context>

<pallas_src>
import functools

import jax
import jax.numpy as jnp
from jax import lax
from jax.experimental import pallas as pl
from jax.experimental.pallas import tpu as pltpu


_LANE = 128
# <= the scoped default on v6e/v7x, well under v5e's physical VMEM.
_VMEM_LIMIT_BYTES = 32 * 1024 * 1024


def _pair(v):
    if isinstance(v, (tuple, list)):
        return int(v[0]), int(v[1])
    return int(v), int(v)


def _round_up(x, m):
    return (x + m - 1) // m * m


# ----------------------------- Pallas kernels --------------------------------

def _make_general_kernel(*, Cin, KH, KW, sh, sw, dh, dw, ph, pw,
                         H, W, Ho, Wo, P_pad, relu, compute_dtype):
    """General conv: NHWC activation block, im2col scratch, one MXU matmul."""
    T = KH * KW
    P = Ho * Wo
    Hp, Wp = H + 2 * ph, W + 2 * pw

    def kernel(x_ref, w_ref, b_ref, o_ref, xpad_ref, col_ref):
        # x_ref   : (1, H, W, Cin)    activation block (NHWC)
        # w_ref   : (Cout, T*Cin)     taps folded into the contraction axis
        # b_ref   : (Cout, 1)         f32 bias (BN already folded)
        # o_ref   : (1, Cout, P_pad)  lane-dense flattened spatial output
        # xpad_ref: (Hp, Wp, Cin)     padded activation staging, compute dtype
        # col_ref : (P_pad, T*Cin)    im2col matrix, compute dtype

        # Zero only the halo (never the whole scratch).  Done every step so
        # the kernel stays correct when the "parallel" batch axis is sharded
        # across TensorCores (a once-at-program_id==0 init would be skipped on
        # the second core).
        if ph > 0:
            xpad_ref[:ph, :, :] = jnp.zeros((ph, Wp, Cin), compute_dtype)
            xpad_ref[ph + H:, :, :] = jnp.zeros((Hp - ph - H, Wp, Cin),
                                                compute_dtype)
        if pw > 0:
            xpad_ref[ph:ph + H, :pw, :] = jnp.zeros((H, pw, Cin),
                                                    compute_dtype)
            xpad_ref[ph:ph + H, pw + W:, :] = jnp.zeros((H, Wp - pw - W, Cin),
                                                        compute_dtype)
        # Interior is fully overwritten every grid step (cast once, here).
        xpad_ref[ph:ph + H, pw:pw + W, :] = x_ref[0].astype(compute_dtype)

        if P_pad != P:   # keep the padded output rows deterministic
            col_ref[P:, :] = jnp.zeros((P_pad - P, T * Cin), compute_dtype)

        # im2col: one (P, Cin) slab per tap -> single deep contraction.
        hc = (Ho - 1) * sh + 1
        wc = (Wo - 1) * sw + 1
        for kh in range(KH):
            for kw in range(KW):
                h0, w0 = kh * dh, kw * dw
                win = xpad_ref[h0:h0 + hc, w0:w0 + wc, :]
                if sh != 1 or sw != 1:
                    win = win[::sh, ::sw, :]
                t = kh * KW + kw
                col_ref[:P, t * Cin:(t + 1) * Cin] = win.reshape(P, Cin)

        # One MXU matmul over the whole (tap, channel) contraction, f32 acc.
        acc = lax.dot_general(
            w_ref[...], col_ref[...],
            dimension_numbers=(((1,), (1,)), ((), ())),
            preferred_element_type=jnp.float32)            # (Cout, P_pad)

        acc = acc + b_ref[...]                             # f32 epilogue
        if relu:
            acc = jnp.maximum(acc, 0.0)
        o_ref[0] = acc.astype(o_ref.dtype)                 # unmasked full-width store

    return kernel


def _make_pointwise_kernel(*, relu, compute_dtype, channels_minor):
    """1x1 / stride-1 / no-pad conv: pure channel matmul, no scratch needed.

    channels_minor=True  -> x block is (1, P, Cin)  (NHWC producer)
    channels_minor=False -> x block is (1, Cin, P)  (NCHW producer, lane-dense)
    """
    def kernel(x_ref, w_ref, b_ref, o_ref):
        xm = x_ref[0].astype(compute_dtype)
        if channels_minor:
            dims = (((1,), (1,)), ((), ()))     # (Cout,Cin) x (P,Cin)^T
        else:
            dims = (((1,), (0,)), ((), ()))     # (Cout,Cin) x (Cin,P)
        acc = lax.dot_general(w_ref[...], xm, dimension_numbers=dims,
                              preferred_element_type=jnp.float32)  # (Cout, P)
        acc = acc + b_ref[...]
        if relu:
            acc = jnp.maximum(acc, 0.0)
        o_ref[0] = acc.astype(o_ref.dtype)

    return kernel


# ----------------------------- wrapper ---------------------------------------

def basic_conv_forward(x, w, b, *, stride=1, padding=0, dilation=1, groups=1,
                       relu=True, bn=None, up_size=0,
                       compute_dtype=jnp.bfloat16, channels_last=False):
    """Forward pass of BasicConv as one fused Pallas TPU kernel.

    x : (N, Cin, H, W) if channels_last=False (PyTorch layout),
        else (N, H, W, Cin)   -- NHWC producers skip the layout transpose.
    w : (Cout, Cin, KH, KW)
    b : (Cout,) or None
    bn: optional dict(gamma, beta, mean, var[, eps]) -- eval-mode BatchNorm
        folded into the conv weight/bias before the kernel runs.
    """
    if groups != 1:
        # TODO(synk): grouped convolution (groups > 1) is not implemented.
        raise NotImplementedError("groups != 1 not supported")

    if channels_last:
        N, H, W, Cin = x.shape
    else:
        N, Cin, H, W = x.shape
    Cout, Cin_w, KH, KW = w.shape
    assert Cin == Cin_w, (Cin, Cin_w)
    sh, sw = _pair(stride)
    ph, pw = _pair(padding)
    dh, dw = _pair(dilation)

    out_dtype = x.dtype
    if b is None:
        b = jnp.zeros((Cout,), jnp.float32)
    b = b.astype(jnp.float32)
    if bn is not None:  # fold eval-mode BatchNorm into conv weight / bias
        inv = bn["gamma"] / jnp.sqrt(bn["var"] + bn.get("eps", 1e-5))
        w = w * inv[:, None, None, None]
        b = (b - bn["mean"]) * inv + bn["beta"]

    Hp, Wp = H + 2 * ph, W + 2 * pw
    Ho = (Hp - (KH - 1) * dh - 1) // sh + 1
    Wo = (Wp - (KW - 1) * dw - 1) // sw + 1
    T, P = KH * KW, Ho * Wo

    b2 = b.reshape(Cout, 1)

    compiler_params = pltpu.CompilerParams(
        dimension_semantics=("parallel",),
        vmem_limit_bytes=_VMEM_LIMIT_BYTES)

    pointwise = (KH == 1 and KW == 1 and ph == 0 and pw == 0
                 and sh == 1 and sw == 1)

    if pointwise:
        # Channel matmul with the flattened spatial axis; metadata-only
        # reshapes, no transpose, no scratch.
        if channels_last:
            xk = x.reshape(N, P, Cin)
            x_spec = pl.BlockSpec((1, P, Cin), lambda n: (n, 0, 0))
        else:
            xk = x.reshape(N, Cin, P)           # NCHW: spatial stays on lanes
            x_spec = pl.BlockSpec((1, Cin, P), lambda n: (n, 0, 0))
        wk = w.reshape(Cout, Cin).astype(compute_dtype)
        kernel = _make_pointwise_kernel(relu=relu, compute_dtype=compute_dtype,
                                        channels_minor=channels_last)
        out_flat = pl.pallas_call(
            kernel,
            out_shape=jax.ShapeDtypeStruct((N, Cout, P), out_dtype),
            grid=(N,),
            in_specs=[x_spec,
                      pl.BlockSpec((Cout, Cin), lambda n: (0, 0)),
                      pl.BlockSpec((Cout, 1), lambda n: (0, 0))],
            out_specs=pl.BlockSpec((1, Cout, P), lambda n: (n, 0, 0)),
            compiler_params=compiler_params,
        )(xk, wk, b2)
        out = out_flat.reshape(N, Cout, Ho, Wo)
    else:
        if channels_last:
            x_nhwc = x
        else:
            # TODO(synk): this transpose is one extra HBM read+write of the
            # activation; feed channels_last=True from an NHWC producer to
            # drop it entirely.
            x_nhwc = jnp.transpose(x, (0, 2, 3, 1))

        # (Cout, Cin, KH, KW) -> (Cout, KH*KW*Cin), tap-major / channel-minor,
        # matching the im2col column order; cast only the matmul operand.
        wk = jnp.transpose(w, (0, 2, 3, 1)).reshape(Cout, T * Cin)
        wk = wk.astype(compute_dtype)

        P_pad = _round_up(P, _LANE)             # lane-dense output stores
        kernel = _make_general_kernel(
            Cin=Cin, KH=KH, KW=KW, sh=sh, sw=sw, dh=dh, dw=dw, ph=ph, pw=pw,
            H=H, W=W, Ho=Ho, Wo=Wo, P_pad=P_pad, relu=relu,
            compute_dtype=compute_dtype)

        out_flat = pl.pallas_call(
            kernel,
            out_shape=jax.ShapeDtypeStruct((N, Cout, P_pad), out_dtype),
            grid=(N,),
            in_specs=[pl.BlockSpec((1, H, W, Cin), lambda n: (n, 0, 0, 0)),
                      pl.BlockSpec((Cout, T * Cin), lambda n: (0, 0)),
                      pl.BlockSpec((Cout, 1), lambda n: (0, 0))],
            out_specs=pl.BlockSpec((1, Cout, P_pad), lambda n: (n, 0, 0)),
            scratch_shapes=[pltpu.VMEM((Hp, Wp, Cin), compute_dtype),
                            pltpu.VMEM((P_pad, T * Cin), compute_dtype)],
            compiler_params=compiler_params,
        )(x_nhwc, wk, b2)
        out = out_flat[:, :, :P].reshape(N, Cout, Ho, Wo)

    if up_size > 0:
        # TODO(synk): bilinear upsample is done with jax.image.resize outside
        # the Pallas kernel (matches nn.Upsample(mode='bilinear'),
        # align_corners=False).
        out = jax.image.resize(out, (N, Cout, up_size, up_size),
                               method="bilinear")
    return out


# ----------------------------- reference -------------------------------------

def _reference(x, w, b, *, stride, padding, dilation, relu, bn=None):
    sh, sw = _pair(stride)
    ph, pw = _pair(padding)
    dh, dw = _pair(dilation)
    dn = lax.conv_dimension_numbers(x.shape, w.shape, ("NCHW", "OIHW", "NCHW"))
    y = lax.conv_general_dilated(
        x, w, window_strides=(sh, sw), padding=((ph, ph), (pw, pw)),
        rhs_dilation=(dh, dw), dimension_numbers=dn,
        precision=lax.Precision.HIGHEST)
    y = y + b[None, :, None, None]
    if bn is not None:
        inv = bn["gamma"] / jnp.sqrt(bn["var"] + bn.get("eps", 1e-5))
        y = (y - bn["mean"][None, :, None, None]) * inv[None, :, None, None] \
            + bn["beta"][None, :, None, None]
    if relu:
        y = jnp.maximum(y, 0.0)
    return y


# ----------------------------- main -------------------------------------------

if __name__ == "__main__":
    key = jax.random.PRNGKey(0)
    kx, kw1, kb1, kw2, kb2, kg, kbt = jax.random.split(key, 7)

    N, Cin, H, W = 2, 16, 16, 16
    Cout = 32
    x = jax.random.normal(kx, (N, Cin, H, W), jnp.float32)

    w1 = 0.1 * jax.random.normal(kw1, (Cout, Cin, 3, 3), jnp.float32)
    b1 = 0.1 * jax.random.normal(kb1, (Cout,), jnp.float32)
    w2 = 0.1 * jax.random.normal(kw2, (Cin, Cin, 1, 1), jnp.float32)
    b2 = 0.1 * jax.random.normal(kb2, (Cin,), jnp.float32)

    # case 1: BasicConv(16, 32, 3, padding=1, relu=True), f32 matmul operands
    conv3x3_f32 = jax.jit(functools.partial(
        basic_conv_forward, stride=1, padding=1, dilation=1, relu=True,
        compute_dtype=jnp.float32))
    y1 = conv3x3_f32(x, w1, b1)
    jax.block_until_ready(y1)
    r1 = _reference(x, w1, b1, stride=1, padding=1, dilation=1, relu=True)
    assert y1.shape == (N, Cout, H, W), y1.shape
    assert jnp.allclose(y1, r1, rtol=0.0, atol=2e-2), \
        float(jnp.max(jnp.abs(y1 - r1)))

    # case 2: BasicConv(16, 16, 1, relu=False) -- pointwise fast path (NCHW,
    # no transpose, no scratch, spatial axis lane-dense)
    conv1x1_f32 = jax.jit(functools.partial(
        basic_conv_forward, stride=1, padding=0, dilation=1, relu=False,
        compute_dtype=jnp.float32))
    y2 = conv1x1_f32(x, w2, b2)
    jax.block_until_ready(y2)
    r2 = _reference(x, w2, b2, stride=1, padding=0, dilation=1, relu=False)
    assert y2.shape == (N, Cin, H, W), y2.shape
    assert jnp.allclose(y2, r2, rtol=0.0, atol=2e-2), \
        float(jnp.max(jnp.abs(y2 - r2)))

    # case 3: same as case 1 with the default bf16 matmul operands (all chips)
    conv3x3_bf16 = jax.jit(functools.partial(
        basic_conv_forward, stride=1, padding=1, dilation=1, relu=True))
    y3 = conv3x3_bf16(x, w1, b1)
    jax.block_until_ready(y3)
    assert jnp.allclose(y3, r1, rtol=0.0, atol=1e-1), \
        float(jnp.max(jnp.abs(y3 - r1)))

    # case 4: BasicConv(..., bn=True) with eval-mode BatchNorm folded, fed by
    # an NHWC producer (channels_last=True skips the wrapper transpose).
    bn = dict(gamma=1.0 + 0.1 * jax.random.normal(kg, (Cout,), jnp.float32),
              beta=0.1 * jax.random.normal(kbt, (Cout,), jnp.float32),
              mean=0.05 * jnp.ones((Cout,), jnp.float32),
              var=0.9 * jnp.ones((Cout,), jnp.float32))
    conv3x3_bn = jax.jit(functools.partial(
        basic_conv_forward, stride=1, padding=1, dilation=1, relu=True,
        bn=bn, channels_last=True))
    x_nhwc = jnp.transpose(x, (0, 2, 3, 1))     # NHWC producer
    y4 = conv3x3_bn(x_nhwc, w1, b1)
    jax.block_until_ready(y4)
    r4 = _reference(x, w1, b1, stride=1, padding=1, dilation=1, relu=True,
                    bn=bn)
    assert y4.shape == (N, Cout, H, W), y4.shape
    assert jnp.allclose(y4, r4, rtol=0.0, atol=1e-1), \
        float(jnp.max(jnp.abs(y4 - r4)))

    print("KERNEL_OK")
</pallas_src>

<mosaic_0001>
module attributes {stable_mosaic.version = 11 : i64} {
  func.func @kernel(%arg0: i32, %arg1: memref<1x16x16x16xf32, #tpu.memory_space<vmem>>, %arg2: memref<32x144xf32, #tpu.memory_space<vmem>>, %arg3: memref<32x1xf32, #tpu.memory_space<vmem>>, %arg4: memref<1x32x256xf32, #tpu.memory_space<vmem>>, %arg5: memref<18x18x16xf32, #tpu.memory_space<vmem>>, %arg6: memref<256x144xf32, #tpu.memory_space<vmem>>) attributes {dimension_semantics = [#tpu.dimension_semantics<parallel>], iteration_bounds = array<i64: 2>, scalar_prefetch = 0 : i64, scratch_operands = 2 : i64, tpu.core_type = #tpu.core_type<tc>, window_params = [{transform_indices = @transform_0, window_bounds = array<i64: 1, 16, 16, 16>}, {pipeline_mode = #tpu.pipeline_mode<synchronous>, transform_indices = @transform_1, window_bounds = array<i64: 32, 144>}, {pipeline_mode = #tpu.pipeline_mode<synchronous>, transform_indices = @transform_2, window_bounds = array<i64: 32, 1>}, {transform_indices = @transform_3, window_bounds = array<i64: 1, 32, 256>}]} {
    %cst = arith.constant 0.000000e+00 : f32
    %0 = vector.broadcast %cst : f32 to vector<1x18x16xf32>
    %c0 = arith.constant 0 : index
    %c0_0 = arith.constant 0 : index
    %c0_1 = arith.constant 0 : index
    %1 = vector.load %arg5[%c0, %c0_0, %c0_1] : memref<18x18x16xf32, #tpu.memory_space<vmem>>, vector<1x18x16xf32>
    tpu.vector_store %arg5[%c0, %c0_0, %c0_1], %0 {strides = array<i32>} : memref<18x18x16xf32, #tpu.memory_space<vmem>>, vector<1x18x16xf32>,
    %cst_2 = arith.constant 0.000000e+00 : f32
    %2 = vector.broadcast %cst_2 : f32 to vector<1x18x16xf32>
    %c17 = arith.constant 17 : index
    %c0_3 = arith.constant 0 : index
    %c0_4 = arith.constant 0 : index
    %3 = vector.load %arg5[%c17, %c0_3, %c0_4] : memref<18x18x16xf32, #tpu.memory_space<vmem>>, vector<1x18x16xf32>
    tpu.vector_store %arg5[%c17, %c0_3, %c0_4], %2 {strides = array<i32>} : memref<18x18x16xf32, #tpu.memory_space<vmem>>, vector<1x18x16xf32>,
    %cst_5 = arith.constant 0.000000e+00 : f32
    %4 = vector.broadcast %cst_5 : f32 to vector<16x1x16xf32>
    %c1 = arith.constant 1 : index
    %c0_6 = arith.constant 0 : index
    %c0_7 = arith.constant 0 : index
    %5 = vector.load %arg5[%c1, %c0_6, %c0_7] : memref<18x18x16xf32, #tpu.memory_space<vmem>>, vector<16x1x16xf32>
    tpu.vector_store %arg5[%c1, %c0_6, %c0_7], %4 {strides = array<i32>} : memref<18x18x16xf32, #tpu.memory_space<vmem>>, vector<16x1x16xf32>,
    %cst_8 = arith.constant 0.000000e+00 : f32
    %6 = vector.broadcast %cst_8 : f32 to vector<16x1x16xf32>
    %c1_9 = arith.constant 1 : index
    %c17_10 = arith.constant 17 : index
    %c0_11 = arith.constant 0 : index
    %7 = vector.load %arg5[%c1_9, %c17_10, %c0_11] : memref<18x18x16xf32, #tpu.memory_space<vmem>>, vector<16x1x16xf32>
    tpu.vector_store %arg5[%c1_9, %c17_10, %c0_11], %6 {strides = array<i32>} : memref<18x18x16xf32, #tpu.memory_space<vmem>>, vector<16x1x16xf32>,
    %c0_12 = arith.constant 0 : index
    %c0_13 = arith.constant 0 : index
    %c0_14 = arith.constant 0 : index
    %c0_15 = arith.constant 0 : index
    %8 = vector.load %arg1[%c0_12, %c0_13, %c0_14, %c0_15] : memref<1x16x16x16xf32, #tpu.memory_space<vmem>>, vector<1x16x16x16xf32>
    %9 = vector.shape_cast %8 : vector<1x16x16x16xf32> to vector<16x16x16xf32>
    %c1_16 = arith.constant 1 : index
    %c1_17 = arith.constant 1 : index
    %c0_18 = arith.constant 0 : index
    %10 = vector.load %arg5[%c1_16, %c1_17, %c0_18] : memref<18x18x16xf32, #tpu.memory_space<vmem>>, vector<16x16x16xf32>
    tpu.vector_store %arg5[%c1_16, %c1_17, %c0_18], %9 {strides = array<i32>} : memref<18x18x16xf32, #tpu.memory_space<vmem>>, vector<16x16x16xf32>,
    %c0_19 = arith.constant 0 : index
    %c0_20 = arith.constant 0 : index
    %c0_21 = arith.constant 0 : index
    %11 = vector.load %arg5[%c0_19, %c0_20, %c0_21] : memref<18x18x16xf32, #tpu.memory_space<vmem>>, vector<16x16x16xf32>
    %12 = vector.shape_cast %11 : vector<16x16x16xf32> to vector<256x16xf32>
    %c0_22 = arith.constant 0 : index
    %c0_23 = arith.constant 0 : index
    %13 = vector.load %arg6[%c0_22, %c0_23] : memref<256x144xf32, #tpu.memory_space<vmem>>, vector<256x16xf32>
    tpu.vector_store %arg6[%c0_22, %c0_23], %12 {strides = array<i32>} : memref<256x144xf32, #tpu.memory_space<vmem>>, vector<256x16xf32>,
    %c0_24 = arith.constant 0 : index
    %c1_25 = arith.constant 1 : index
    %c0_26 = arith.constant 0 : index
    %14 = vector.load %arg5[%c0_24, %c1_25, %c0_26] : memref<18x18x16xf32, #tpu.memory_space<vmem>>, vector<16x16x16xf32>
    %15 = vector.shape_cast %14 : vector<16x16x16xf32> to vector<256x16xf32>
    %c0_27 = arith.constant 0 : index
    %c16 = arith.constant 16 : index
    %16 = vector.load %arg6[%c0_27, %c16] : memref<256x144xf32, #tpu.memory_space<vmem>>, vector<256x16xf32>
    tpu.vector_store %arg6[%c0_27, %c16], %15 {strides = array<i32>} : memref<256x144xf32, #tpu.memory_space<vmem>>, vector<256x16xf32>,
    %c0_28 = arith.constant 0 : index
    %c2 = arith.constant 2 : index
    %c0_29 = arith.constant 0 : index
    %17 = vector.load %arg5[%c0_28, %c2, %c0_29] : memref<18x18x16xf32, #tpu.memory_space<vmem>>, vector<16x16x16xf32>
    %18 = vector.shape_cast %17 : vector<16x16x16xf32> to vector<256x16xf32>
    %c0_30 = arith.constant 0 : index
    %c32 = arith.constant 32 : index
    %19 = vector.load %arg6[%c0_30, %c32] : memref<256x144xf32, #tpu.memory_space<vmem>>, vector<256x16xf32>
    tpu.vector_store %arg6[%c0_30, %c32], %18 {strides = array<i32>} : memref<256x144xf32, #tpu.memory_space<vmem>>, vector<256x16xf32>,
    %c1_31 = arith.constant 1 : index
    %c0_32 = arith.constant 0 : index
    %c0_33 = arith.constant 0 : index
    %20 = vector.load %arg5[%c1_31, %c0_32, %c0_33] : memref<18x18x16xf32, #tpu.memory_space<vmem>>, vector<16x16x16xf32>
    %21 = vector.shape_cast %20 : vector<16x16x16xf32> to vector<256x16xf32>
    %c0_34 = arith.constant 0 : index
    %c48 = arith.constant 48 : index
    %22 = vector.load %arg6[%c0_34, %c48] : memref<256x144xf32, #tpu.memory_space<vmem>>, vector<256x16xf32>
    tpu.vector_store %arg6[%c0_34, %c48], %21 {strides = array<i32>} : memref<256x144xf32, #tpu.memory_space<vmem>>, vector<256x16xf32>,
    %c1_35 = arith.constant 1 : index
    %c1_36 = arith.constant 1 : index
    %c0_37 = arith.constant 0 : index
    %23 = vector.load %arg5[%c1_35, %c1_36, %c0_37] : memref<18x18x16xf32, #tpu.memory_space<vmem>>, vector<16x16x16xf32>
    %24 = vector.shape_cast %23 : vector<16x16x16xf32> to vector<256x16xf32>
    %c0_38 = arith.constant 0 : index
    %c64 = arith.constant 64 : index
    %25 = vector.load %arg6[%c0_38, %c64] : memref<256x144xf32, #tpu.memory_space<vmem>>, vector<256x16xf32>
    tpu.vector_store %arg6[%c0_38, %c64], %24 {strides = array<i32>} : memref<256x144xf32, #tpu.memory_space<vmem>>, vector<256x16xf32>,
    %c1_39 = arith.constant 1 : index
    %c2_40 = arith.constant 2 : index
    %c0_41 = arith.constant 0 : index
    %26 = vector.load %arg5[%c1_39, %c2_40, %c0_41] : memref<18x18x16xf32, #tpu.memory_space<vmem>>, vector<16x16x16xf32>
    %27 = vector.shape_cast %26 : vector<16x16x16xf32> to vector<256x16xf32>
    %c0_42 = arith.constant 0 : index
    %c80 = arith.constant 80 : index
    %28 = vector.load %arg6[%c0_42, %c80] : memref<256x144xf32, #tpu.memory_space<vmem>>, vector<256x16xf32>
    tpu.vector_store %arg6[%c0_42, %c80], %27 {strides = array<i32>} : memref<256x144xf32, #tpu.memory_space<vmem>>, vector<256x16xf32>,
    %c2_43 = arith.constant 2 : index
    %c0_44 = arith.constant 0 : index
    %c0_45 = arith.constant 0 : index
    %29 = vector.load %arg5[%c2_43, %c0_44, %c0_45] : memref<18x18x16xf32, #tpu.memory_space<vmem>>, vector<16x16x16xf32>
    %30 = vector.shape_cast %29 : vector<16x16x16xf32> to vector<256x16xf32>
    %c0_46 = arith.constant 0 : index
    %c96 = arith.constant 96 : index
    %31 = vector.load %arg6[%c0_46, %c96] : memref<256x144xf32, #tpu.memory_space<vmem>>, vector<256x16xf32>
    tpu.vector_store %arg6[%c0_46, %c96], %30 {strides = array<i32>} : memref<256x144xf32, #tpu.memory_space<vmem>>, vector<256x16xf32>,
    %c2_47 = arith.constant 2 : index
    %c1_48 = arith.constant 1 : index
    %c0_49 = arith.constant 0 : index
    %32 = vector.load %arg5[%c2_47, %c1_48, %c0_49] : memref<18x18x16xf32, #tpu.memory_space<vmem>>, vector<16x16x16xf32>
    %33 = vector.shape_cast %32 : vector<16x16x16xf32> to vector<256x16xf32>
    %c0_50 = arith.constant 0 : index
    %c112 = arith.constant 112 : index
    %34 = vector.load %arg6[%c0_50, %c112] : memref<256x144xf32, #tpu.memory_space<vmem>>, vector<256x16xf32>
    tpu.vector_store %arg6[%c0_50, %c112], %33 {strides = array<i32>} : memref<256x144xf32, #tpu.memory_space<vmem>>, vector<256x16xf32>,
    %c2_51 = arith.constant 2 : index
    %c2_52 = arith.constant 2 : index
    %c0_53 = arith.constant 0 : index
    %35 = vector.load %arg5[%c2_51, %c2_52, %c0_53] : memref<18x18x16xf32, #tpu.memory_space<vmem>>, vector<16x16x16xf32>
    %36 = vector.shape_cast %35 : vector<16x16x16xf32> to vector<256x16xf32>
    %c0_54 = arith.constant 0 : index
    %c128 = arith.constant 128 : index
    %37 = vector.load %arg6[%c0_54, %c128] : memref<256x144xf32, #tpu.memory_space<vmem>>, vector<256x16xf32>
    tpu.vector_store %arg6[%c0_54, %c128], %36 {strides = array<i32>} : memref<256x144xf32, #tpu.memory_space<vmem>>, vector<256x16xf32>,
    %c0_55 = arith.constant 0 : index
    %c0_56 = arith.constant 0 : index
    %38 = vector.load %arg2[%c0_55, %c0_56] : memref<32x144xf32, #tpu.memory_space<vmem>>, vector<32x144xf32>
    %c0_57 = arith.constant 0 : index
    %c0_58 = arith.constant 0 : index
    %39 = vector.load %arg6[%c0_57, %c0_58] : memref<256x144xf32, #tpu.memory_space<vmem>>, vector<256x144xf32>
    %cst_59 = arith.constant dense<0.000000e+00> : vector<32x256xf32>
    %40 = tpu.matmul %38, %39, %cst_59 {dimension_numbers = #tpu.dot_dimension_numbers<[1], [1], [0], [0], [0, 0, 1, 0], [], []>} : vector<32x144xf32>, vector<256x144xf32>, vector<32x256xf32> -> vector<32x256xf32>
    %c0_60 = arith.constant 0 : index
    %c0_61 = arith.constant 0 : index
    %41 = vector.load %arg3[%c0_60, %c0_61] : memref<32x1xf32, #tpu.memory_space<vmem>>, vector<32x1xf32>
    %42 = vector.broadcast %41 : vector<32x1xf32> to vector<32x256xf32>
    %43 = arith.addf %40, %42 : vector<32x256xf32>
    %cst_62 = arith.constant 0.000000e+00 : f32
    %44 = vector.broadcast %cst_62 : f32 to vector<32x256xf32>
    %45 = arith.maximumf %43, %44 : vector<32x256xf32>
    %c0_63 = arith.constant 0 : index
    %c0_64 = arith.constant 0 : index
    %c0_65 = arith.constant 0 : index
    %46 = vector.load %arg4[%c0_63, %c0_64, %c0_65] : memref<1x32x256xf32, #tpu.memory_space<vmem>>, vector<1x32x256xf32>
    %47 = vector.shape_cast %46 : vector<1x32x256xf32> to vector<32x256xf32>
    %48 = vector.shape_cast %45 : vector<32x256xf32> to vector<1x32x256xf32>
    tpu.vector_store %arg4[%c0_63, %c0_64, %c0_65], %48 {strides = array<i32>} : memref<1x32x256xf32, #tpu.memory_space<vmem>>, vector<1x32x256xf32>,
    return
  }
  func.func @transform_0(%arg0: i32) -> (i32, i32, i32, i32) {
    %c0_i32 = arith.constant 0 : i32
    %c0_i32_0 = arith.constant 0 : i32
    %c0_i32_1 = arith.constant 0 : i32
    %c0_i32_2 = arith.constant 0 : i32
    return %arg0, %c0_i32, %c0_i32_0, %c0_i32_1 : i32, i32, i32, i32
  }
  func.func @transform_1(%arg0: i32) -> (i32, i32) {
    %c0_i32 = arith.constant 0 : i32
    %c0_i32_0 = arith.constant 0 : i32
    %c0_i32_1 = arith.constant 0 : i32
    return %c0_i32, %c0_i32_0 : i32, i32
  }
  func.func @transform_2(%arg0: i32) -> (i32, i32) {
    %c0_i32 = arith.constant 0 : i32
    %c0_i32_0 = arith.constant 0 : i32
    %c0_i32_1 = arith.constant 0 : i32
    return %c0_i32, %c0_i32_0 : i32, i32
  }
  func.func @transform_3(%arg0: i32) -> (i32, i32, i32) {
    %c0_i32 = arith.constant 0 : i32
    %c0_i32_0 = arith.constant 0 : i32
    %c0_i32_1 = arith.constant 0 : i32
    return %arg0, %c0_i32, %c0_i32_0 : i32, i32, i32
  }
}

</mosaic_0001>

<llo_original>
// kernel: basic_conv_forward.1
$region0: #{basic_conv_forward.1}
  #allocation0 [shape = 'u32[]', space=smem, size = 0x4, offset = 0x4, fixed_abs, tag = 'smem constant byte address 0x4 - core index']
  #allocation1 [shape = 'u32[144,128]{1,0:T(1,128)}', space=vmem, size = 0x12000, scoped, tag = 'internal scratch']
  #allocation2 [shape = 'f32[18,18,16]{2,1,0:T(8,128)}', space=vmem, size = 0x36000, scoped, tag = 'scratch operand']
  #allocation3 [shape = 'f32[256,144]{1,0:T(8,128)}', space=vmem, size = 0x40000, scoped, tag = 'scratch operand']
  %s0 = inlined_call_operand.vmem [shape: f32[2,16,16,16], index: 0, kind: input, shape index: {}]
  %s1 = inlined_call_operand.vmem [shape: f32[32,144], index: 1, kind: input, shape index: {}]
  %s2 = inlined_call_operand.vmem [shape: f32[32,1], index: 2, kind: input, shape index: {}]
  %s3 = inlined_call_operand.vmem [shape: f32[2,32,256], index: 3, kind: output, shape index: {}]
  %s4 = sld [smem:[#allocation0]]
  $region45: #{basic_conv_forward.1} parent=0
    _
  %s6 = ssub.s32 1, %s4
  %s7 = scalar_select 0, %s6, %s4
  loop: start=0, step=1, limit=4
  $region2: #{basic_conv_forward.1} parent=0 // loop_pre_header
    _
  $region3: #{basic_conv_forward.1} parent=0 // loop_header
    %s9 = sphi 0, %s13
    %p10 = scmp.ge.s32.totalorder %s9, 4
    %s19 = sphi 0, %s21
    %s22 = sphi 0, %s19
    %s23 = sphi 0, %s22
    %s39 = sphi 0, %s23
    %s43 = sphi 0, %s43
    %s45 = sphi 0, %s43
    %s46 = sphi 0, %s45
    %s60 = sphi 0, %s46
    %s64 = sphi 0, %s64
    %s66 = sphi 0, %s64
    %s67 = sphi 0, %s66
    %s81 = sphi 0, %s67
    %s87 = sphi 0, %s89
    %s90 = sphi 0, %s87
    %s91 = sphi 0, %s90
    %s107 = sphi 0, %s91
  $region4: #{basic_conv_forward.1} parent=0 // loop_header_branch
    %12 = sbr.rel (%p10) target = $region8
  $region5: #{basic_conv_forward.1} parent=0 // loop_body
    %s14 = ssub.s32 %s9, 1
    %s15 = ssub.s32 %s9, 2
    %s16 = sadd.s32 %s9, 1
    %s17 = ssub.s32 %s9, %s16
    %p18 = scmp.eq.s32.totalorder %s17, 0
    %s20 = sadd.s32 %s19, 1
    %s21 = scalar_select %p18, %s19, %s20
    %p24 = pneg %p18
    %p25 = scmp.eq.s32.totalorder %s9, 1
    %p26 = por %p24, %p25
    %p27 = scmp.ne.s32.totalorder %s19, %s22
    %p28 = scmp.eq.s32.totalorder %s9, 0
    %p29 = por %p27, %p28
    %p30 = scmp.ne.s32.totalorder %s19, %s22
    %p31 = scmp.eq.s32.totalorder %s14, 1
    %p32 = por %p30, %p31
    %p33 = scmp.ne.s32.totalorder %s22, %s23
    %p34 = scmp.eq.s32.totalorder %s14, 0
    %p35 = por %p33, %p34
    %p36 = scmp.ne.s32.totalorder %s22, %s23
    %p37 = scmp.eq.s32.totalorder %s15, 1
    %p38 = por %p36, %p37
    %p40 = scmp.ne.s32.totalorder %s23, %s39
    %p41 = scmp.eq.s32.totalorder %s15, 0
    %p42 = por %p40, %p41
    %s44 = sadd.s32 %s43, 1
    %p47 = scmp.eq.s32.totalorder %s9, 1
    %p48 = scmp.ne.s32.totalorder %s43, %s45
    %p49 = scmp.eq.s32.totalorder %s9, 0
    %p50 = por %p48, %p49
    %p51 = scmp.ne.s32.totalorder %s43, %s45
    %p52 = scmp.eq.s32.totalorder %s14, 1
    %p53 = por %p51, %p52
    %p54 = scmp.ne.s32.totalorder %s45, %s46
    %p55 = scmp.eq.s32.totalorder %s14, 0
    %p56 = por %p54, %p55
    %p57 = scmp.ne.s32.totalorder %s45, %s46
    %p58 = scmp.eq.s32.totalorder %s15, 1
    %p59 = por %p57, %p58
    %p61 = scmp.ne.s32.totalorder %s46, %s60
    %p62 = scmp.eq.s32.totalorder %s15, 0
    %p63 = por %p61, %p62
    %s65 = sadd.s32 %s64, 1
    %p68 = scmp.eq.s32.totalorder %s9, 1
    %p69 = scmp.ne.s32.totalorder %s64, %s66
    %p70 = scmp.eq.s32.totalorder %s9, 0
    %p71 = por %p69, %p70
    %p72 = scmp.ne.s32.totalorder %s64, %s66
    %p73 = scmp.eq.s32.totalorder %s14, 1
    %p74 = por %p72, %p73
    %p75 = scmp.ne.s32.totalorder %s66, %s67
    %p76 = scmp.eq.s32.totalorder %s14, 0
    %p77 = por %p75, %p76
    %p78 = scmp.ne.s32.totalorder %s66, %s67
    %p79 = scmp.eq.s32.totalorder %s15, 1
    %p80 = por %p78, %p79
    %p82 = scmp.ne.s32.totalorder %s67, %s81
    %p83 = scmp.eq.s32.totalorder %s15, 0
    %p84 = por %p82, %p83
    %s85 = ssub.s32 %s9, %s16
    %p86 = scmp.eq.s32.totalorder %s85, 0
    %s88 = sadd.s32 %s87, 1
    %s89 = scalar_select %p86, %s87, %s88
    %p92 = pneg %p86
    %p93 = scmp.eq.s32.totalorder %s9, 1
    %p94 = por %p92, %p93
    %p95 = scmp.ne.s32.totalorder %s87, %s90
    %p96 = scmp.eq.s32.totalorder %s9, 0
    %p97 = por %p95, %p96
    %p98 = scmp.ne.s32.totalorder %s87, %s90
    %p99 = scmp.eq.s32.totalorder %s14, 1
    %p100 = por %p98, %p99
    %p101 = scmp.ne.s32.totalorder %s90, %s91
    %p102 = scmp.eq.s32.totalorder %s14, 0
    %p103 = por %p101, %p102
    %p104 = scmp.ne.s32.totalorder %s90, %s91
    %p105 = scmp.eq.s32.totalorder %s15, 1
    %p106 = por %p104, %p105
    %p108 = scmp.ne.s32.totalorder %s91, %s107
    %p109 = scmp.eq.s32.totalorder %s15, 0
    %p110 = por %p108, %p109
    %p111 = scmp.le.s32.totalorder 1, %s9
    %p112 = scmp.lt.s32.totalorder %s9, 3
    %p113 = pnand %p111, %p112
    %p114 = pneg %p113
    // Predicated region
    $region9: #{basic_conv_forward.1} parent=5 // pred_check
      _
    $region10: #{basic_conv_forward.1} parent=5 // pred_check_branch
      %116 = sbr.rel (%p113) target = $region12
    $region11: #{basic_conv_forward.1} parent=5 // pred_region
      %s117 = ssub.s32 %s9, 1
      // Predicated region
      $region13: #{basic_conv_forward.1} parent=11 // pred_check
        %p118 = pneg %p56
      $region14: #{basic_conv_forward.1} parent=11 // pred_check_branch
        %120 = sbr.rel (%p118) target = $region16
      $region15: #{basic_conv_forward.1} parent=11 // pred_region
        _
      $region16: #{basic_conv_forward.1} parent=11 // pred_fallthru
        _
      // Predicated region
      $region17: #{basic_conv_forward.1} parent=11 // pred_check
        %p121 = pneg %p77
      $region18: #{basic_conv_forward.1} parent=11 // pred_check_branch
        %123 = sbr.rel (%p121) target = $region20
      $region19: #{basic_conv_forward.1} parent=11 // pred_region
        _
      $region20: #{basic_conv_forward.1} parent=11 // pred_fallthru
        _
    $region12: #{basic_conv_forward.1} parent=5 // pred_fallthru
      _
    %p124 = scmp.lt.s32.totalorder %s9, 2
    // Predicated region
    $region21: #{basic_conv_forward.1} parent=5 // pred_check
      %p125 = pneg %p124
    $region22: #{basic_conv_forward.1} parent=5 // pred_check_branch
      %127 = sbr.rel (%p125) target = $region24
    $region23: #{basic_conv_forward.1} parent=5 // pred_region
      // Predicated region
      $region25: #{basic_conv_forward.1} parent=23 // pred_check
        %p128 = pneg %p29
      $region26: #{basic_conv_forward.1} parent=23 // pred_check_branch
        %130 = sbr.rel (%p128) target = $region28
      $region27: #{basic_conv_forward.1} parent=23 // pred_region
        %p131 = scmp.lt.s32.totalorder %s9, 1
        %s132 = scalar_select %p131, %s9, 1
        %s133 = smul.addr %s132, 32
        %s134 = smul.addr %s133, 8
        %s135 = scalar_lea.vmem %s0, %s134
      $region28: #{basic_conv_forward.1} parent=23 // pred_fallthru
        _
    $region24: #{basic_conv_forward.1} parent=5 // pred_fallthru
      _
    %p136 = scmp.le.s32.totalorder 1, %s9
    %p137 = scmp.lt.s32.totalorder %s9, 3
    %p138 = pnand %p136, %p137
    %p139 = pneg %p138
    // Predicated region
    $region29: #{basic_conv_forward.1} parent=5 // pred_check
      _
    $region30: #{basic_conv_forward.1} parent=5 // pred_check_branch
      %141 = sbr.rel (%p138) target = $region32
    $region31: #{basic_conv_forward.1} parent=5 // pred_region
      %s142 = ssub.s32 %s9, 1
      %p143 = scmp.lt.s32.totalorder %s14, 1
      %s144 = scalar_select %p143, %s14, 1
      %s145 = smul.addr %s144, 32
      %s146 = smul.addr %s145, 8
      %s147 = scalar_lea.vmem %s0, %s146
      %p148 = pneg %p35
      %p149 = pneg %p32
      %p150 = pneg %p56
      %p151 = pneg %p53
      %p152 = pneg %p77
      %p153 = pneg %p74
      %p154 = pneg %p103
      %p155 = pneg %p100
      %p156 = scmp.lt.s32.totalorder %s14, 1
      %s157 = scalar_select %p156, %s14, 1
      %s158 = smul.addr %s157, 8
      %s159 = smul.addr %s158, 8
      %s160 = scalar_lea.vmem %s3, %s159
      %p161 = scmp.lt.s32.totalorder %s14, 1
      %s162 = scalar_select %p161, %s14, 1
      %s163 = smul.addr %s162, 32
      %s164 = smul.addr %s163, 8
      %s165 = scalar_lea.vmem %s0, %s164
      %p166 = scmp.lt.s32.totalorder %s14, 1
      %s167 = scalar_select %p166, %s14, 1
      %s168 = smul.addr %s167, 8
      %s169 = smul.addr %s168, 8
      %s170 = scalar_lea.vmem %s3, %s169
      %vm171 = vcmask 130048
      %172 = vst.msk [vmem:[#allocation2] sm:$0xff] %vm171, 0.0
      %173 = vst.msk [vmem:[#allocation2 + $0x8] sm:$0xff] %vm171, 0.0
      %vm174 = vcmask 123904
      %175 = vst.msk [vmem:[#allocation2 + $0x10] sm:$0x3] %vm174, 0.0
      %s176 = scalar_lea.vmem [#allocation2], 408
      %177 = vst.msk [vmem:[%s176] sm:$0xff] %vm171, 0.0
      %178 = vst.msk [vmem:[%s176 + $0x8] sm:$0xff] %vm171, 0.0
      %179 = vst.msk [vmem:[%s176 + $0x10] sm:$0x3] %vm174, 0.0
      %s180 = scalar_lea.vmem [#allocation2], 24
      %vm181 = vcmask 122880
      %182 = vst.msk [vmem:[%s180] sm:$0x1] %vm181, 0.0
      %183 = vst.msk [vmem:[%s180 + $0x18] sm:$0x1] %vm181, 0.0
      %184 = vst.msk [vmem:[%s180 + $0x30] sm:$0x1] %vm181, 0.0
      %185 = vst.msk [vmem:[%s180 + $0x48] sm:$0x1] %vm181, 0.0
      %186 = vst.msk [vmem:[%s180 + $0x60] sm:$0x1] %vm181, 0.0
      %187 = vst.msk [vmem:[%s180 + $0x78] sm:$0x1] %vm181, 0.0
      %188 = vst.msk [vmem:[%s180 + $0x90] sm:$0x1] %vm181, 0.0
      %189 = vst.msk [vmem:[%s180 + $0xa8] sm:$0x1] %vm181, 0.0
      %190 = vst.msk [vmem:[%s180 + $0xc0] sm:$0x1] %vm181, 0.0
      %191 = vst.msk [vmem:[%s180 + $0xd8] sm:$0x1] %vm181, 0.0
      %192 = vst.msk [vmem:[%s180 + $0xf0] sm:$0x1] %vm181, 0.0
      %193 = vst.msk [vmem:[%s180 + $0x108] sm:$0x1] %vm181, 0.0
      %194 = vst.msk [vmem:[%s180 + $0x120] sm:$0x1] %vm181, 0.0
      %195 = vst.msk [vmem:[%s180 + $0x138] sm:$0x1] %vm181, 0.0
      %196 = vst.msk [vmem:[%s180 + $0x150] sm:$0x1] %vm181, 0.0
      %197 = vst.msk [vmem:[%s180 + $0x168] sm:$0x1] %vm181, 0.0
      %198 = vst.msk [vmem:[%s180 + $0x11] sm:$0x1] %vm181, 0.0
      %199 = vst.msk [vmem:[%s180 + $0x29] sm:$0x1] %vm181, 0.0
      %200 = vst.msk [vmem:[%s180 + $0x41] sm:$0x1] %vm181, 0.0
      %201 = vst.msk [vmem:[%s180 + $0x59] sm:$0x1] %vm181, 0.0
      %202 = vst.msk [vmem:[%s180 + $0x71] sm:$0x1] %vm181, 0.0
      %203 = vst.msk [vmem:[%s180 + $0x89] sm:$0x1] %vm181, 0.0
      %204 = vst.msk [vmem:[%s180 + $0xa1] sm:$0x1] %vm181, 0.0
      %205 = vst.msk [vmem:[%s180 + $0xb9] sm:$0x1] %vm181, 0.0
      %206 = vst.msk [vmem:[%s180 + $0xd1] sm:$0x1] %vm181, 0.0
      %207 = vst.msk [vmem:[%s180 + $0xe9] sm:$0x1] %vm181, 0.0
      %208 = vst.msk [vmem:[%s180 + $0x101] sm:$0x1] %vm181, 0.0
      %209 = vst.msk [vmem:[%s180 + $0x119] sm:$0x1] %vm181, 0.0
      %210 = vst.msk [vmem:[%s180 + $0x131] sm:$0x1] %vm181, 0.0
      %211 = vst.msk [vmem:[%s180 + $0x149] sm:$0x1] %vm181, 0.0
      %212 = vst.msk [vmem:[%s180 + $0x161] sm:$0x1] %vm181, 0.0
      %213 = vst.msk [vmem:[%s180 + $0x179] sm:$0x1] %vm181, 0.0
      %v214 = vld [vmem:[%s165] sm:$0xff]
      %v215 = vld [vmem:[%s165 + $0x8] sm:$0xff]
      %v216 = vld [vmem:[%s165 + $0x10] sm:$0xff]
      %v217 = vld [vmem:[%s165 + $0x18] sm:$0xff]
      %v218 = vld [vmem:[%s165 + $0x20] sm:$0xff]
      %v219 = vld [vmem:[%s165 + $0x28] sm:$0xff]
      %v220 = vld [vmem:[%s165 + $0x30] sm:$0xff]
      %v221 = vld [vmem:[%s165 + $0x38] sm:$0xff]
      %v222 = vld [vmem:[%s165 + $0x40] sm:$0xff]
      %v223 = vld [vmem:[%s165 + $0x48] sm:$0xff]
      %v224 = vld [vmem:[%s165 + $0x50] sm:$0xff]
      %v225 = vld [vmem:[%s165 + $0x58] sm:$0xff]
      %v226 = vld [vmem:[%s165 + $0x60] sm:$0xff]
      %v227 = vld [vmem:[%s165 + $0x68] sm:$0xff]
      %v228 = vld [vmem:[%s165 + $0x70] sm:$0xff]
      %v229 = vld [vmem:[%s165 + $0x78] sm:$0xff]
      %v230 = vld [vmem:[%s165 + $0x80] sm:$0xff]
      %v231 = vld [vmem:[%s165 + $0x88] sm:$0xff]
      %v232 = vld [vmem:[%s165 + $0x90] sm:$0xff]
      %v233 = vld [vmem:[%s165 + $0x98] sm:$0xff]
      %v234 = vld [vmem:[%s165 + $0xa0] sm:$0xff]
      %v235 = vld [vmem:[%s165 + $0xa8] sm:$0xff]
      %v236 = vld [vmem:[%s165 + $0xb0] sm:$0xff]
      %v237 = vld [vmem:[%s165 + $0xb8] sm:$0xff]
      %v238 = vld [vmem:[%s165 + $0xc0] sm:$0xff]
      %v239 = vld [vmem:[%s165 + $0xc8] sm:$0xff]
      %v240 = vld [vmem:[%s165 + $0xd0] sm:$0xff]
      %v241 = vld [vmem:[%s165 + $0xd8] sm:$0xff]
      %v242 = vld [vmem:[%s165 + $0xe0] sm:$0xff]
      %v243 = vld [vmem:[%s165 + $0xe8] sm:$0xff]
      %v244 = vld [vmem:[%s165 + $0xf0] sm:$0xff]
      %v245 = vld [vmem:[%s165 + $0xf8] sm:$0xff]
      %246 = vst.msk [vmem:[%s180 + $0x1] sm:$0xff] %vm171, %v214
      %247 = vst.msk [vmem:[%s180 + $0x9] sm:$0xff] %vm171, %v215
      %248 = vst.msk [vmem:[%s180 + $0x19] sm:$0xff] %vm171, %v216
      %249 = vst.msk [vmem:[%s180 + $0x21] sm:$0xff] %vm171, %v217
      %250 = vst.msk [vmem:[%s180 + $0x31] sm:$0xff] %vm171, %v218
      %251 = vst.msk [vmem:[%s180 + $0x39] sm:$0xff] %vm171, %v219
      %252 = vst.msk [vmem:[%s180 + $0x49] sm:$0xff] %vm171, %v220
      %253 = vst.msk [vmem:[%s180 + $0x51] sm:$0xff] %vm171, %v221
      %254 = vst.msk [vmem:[%s180 + $0x61] sm:$0xff] %vm171, %v222
      %255 = vst.msk [vmem:[%s180 + $0x69] sm:$0xff] %vm171, %v223
      %256 = vst.msk [vmem:[%s180 + $0x79] sm:$0xff] %vm171, %v224
      %257 = vst.msk [vmem:[%s180 + $0x81] sm:$0xff] %vm171, %v225
      %258 = vst.msk [vmem:[%s180 + $0x91] sm:$0xff] %vm171, %v226
      %259 = vst.msk [vmem:[%s180 + $0x99] sm:$0xff] %vm171, %v227
      %260 = vst.msk [vmem:[%s180 + $0xa9] sm:$0xff] %vm171, %v228
      %261 = vst.msk [vmem:[%s180 + $0xb1] sm:$0xff] %vm171, %v229
      %262 = vst.msk [vmem:[%s180 + $0xc1] sm:$0xff] %vm171, %v230
      %263 = vst.msk [vmem:[%s180 + $0xc9] sm:$0xff] %vm171, %v231
      %264 = vst.msk [vmem:[%s180 + $0xd9] sm:$0xff] %vm171, %v232
      %265 = vst.msk [vmem:[%s180 + $0xe1] sm:$0xff] %vm171, %v233
      %266 = vst.msk [vmem:[%s180 + $0xf1] sm:$0xff] %vm171, %v234
      %267 = vst.msk [vmem:[%s180 + $0xf9] sm:$0xff] %vm171, %v235
      %268 = vst.msk [vmem:[%s180 + $0x109] sm:$0xff] %vm171, %v236
      %269 = vst.msk [vmem:[%s180 + $0x111] sm:$0xff] %vm171, %v237
      %270 = vst.msk [vmem:[%s180 + $0x121] sm:$0xff] %vm171, %v238
      %271 = vst.msk [vmem:[%s180 + $0x129] sm:$0xff] %vm171, %v239
      %272 = vst.msk [vmem:[%s180 + $0x139] sm:$0xff] %vm171, %v240
      %273 = vst.msk [vmem:[%s180 + $0x141] sm:$0xff] %vm171, %v241
      %274 = vst.msk [vmem:[%s180 + $0x151] sm:$0xff] %vm171, %v242
      %275 = vst.msk [vmem:[%s180 + $0x159] sm:$0xff] %vm171, %v243
      %276 = vst.msk [vmem:[%s180 + $0x169] sm:$0xff] %vm171, %v244
      %277 = vst.msk [vmem:[%s180 + $0x171] sm:$0xff] %vm171, %v245
      %v278 = vld [vmem:[#allocation2] sm:$0xff]
      %v279 = vld [vmem:[#allocation2 + $0x8] sm:$0xff]
      %v280 = vld [vmem:[#allocation2 + $0x18] sm:$0xff]
      %v281 = vld [vmem:[#allocation2 + $0x20] sm:$0xff]
      %v282 = vld [vmem:[#allocation2 + $0x30] sm:$0xff]
      %v283 = vld [vmem:[#allocation2 + $0x38] sm:$0xff]
      %v284 = vld [vmem:[#allocation2 + $0x48] sm:$0xff]
      %v285 = vld [vmem:[#allocation2 + $0x50] sm:$0xff]
      %v286 = vld [vmem:[#allocation2 + $0x60] sm:$0xff]
      %v287 = vld [vmem:[#allocation2 + $0x68] sm:$0xff]
      %v288 = vld [vmem:[#allocation2 + $0x78] sm:$0xff]
      %v289 = vld [vmem:[#allocation2 + $0x80] sm:$0xff]
      %v290 = vld [vmem:[#allocation2 + $0x90] sm:$0xff]
      %v291 = vld [vmem:[#allocation2 + $0x98] sm:$0xff]
      %v292 = vld [vmem:[#allocation2 + $0xa8] sm:$0xff]
      %v293 = vld [vmem:[#allocation2 + $0xb0] sm:$0xff]
      %v294 = vld [vmem:[#allocation2 + $0xc0] sm:$0xff]
      %v295 = vld [vmem:[#allocation2 + $0xc8] sm:$0xff]
      %v296 = vld [vmem:[#allocation2 + $0xd8] sm:$0xff]
      %v297 = vld [vmem:[#allocation2 + $0xe0] sm:$0xff]
      %v298 = vld [vmem:[#allocation2 + $0xf0] sm:$0xff]
      %v299 = vld [vmem:[#allocation2 + $0xf8] sm:$0xff]
      %v300 = vld [vmem:[#allocation2 + $0x108] sm:$0xff]
      %v301 = vld [vmem:[#allocation2 + $0x110] sm:$0xff]
      %v302 = vld [vmem:[#allocation2 + $0x120] sm:$0xff]
      %v303 = vld [vmem:[#allocation2 + $0x128] sm:$0xff]
      %v304 = vld [vmem:[#allocation2 + $0x138] sm:$0xff]
      %v305 = vld [vmem:[#allocation2 + $0x140] sm:$0xff]
      %v306 = vld [vmem:[#allocation2 + $0x150] sm:$0xff]
      %v307 = vld [vmem:[#allocation2 + $0x158] sm:$0xff]
      %v308 = vld [vmem:[#allocation2 + $0x168] sm:$0xff]
      %v309 = vld [vmem:[#allocation2 + $0x170] sm:$0xff]
      %310 = vst.msk [vmem:[#allocation3] sm:$0xff] %vm171, %v278
      %311 = vst.msk [vmem:[#allocation3 + $0x10] sm:$0xff] %vm171, %v279
      %312 = vst.msk [vmem:[#allocation3 + $0x20] sm:$0xff] %vm171, %v280
      %313 = vst.msk [vmem:[#allocation3 + $0x30] sm:$0xff] %vm171, %v281
      %314 = vst.msk [vmem:[#allocation3 + $0x40] sm:$0xff] %vm171, %v282
      %315 = vst.msk [vmem:[#allocation3 + $0x50] sm:$0xff] %vm171, %v283
      %316 = vst.msk [vmem:[#allocation3 + $0x60] sm:$0xff] %vm171, %v284
      %317 = vst.msk [vmem:[#allocation3 + $0x70] sm:$0xff] %vm171, %v285
      %318 = vst.msk [vmem:[#allocation3 + $0x80] sm:$0xff] %vm171, %v286
      %319 = vst.msk [vmem:[#allocation3 + $0x90] sm:$0xff] %vm171, %v287
      %320 = vst.msk [vmem:[#allocation3 + $0xa0] sm:$0xff] %vm171, %v288
      %321 = vst.msk [vmem:[#allocation3 + $0xb0] sm:$0xff] %vm171, %v289
      %322 = vst.msk [vmem:[#allocation3 + $0xc0] sm:$0xff] %vm171, %v290
      %323 = vst.msk [vmem:[#allocation3 + $0xd0] sm:$0xff] %vm171, %v291
      %324 = vst.msk [vmem:[#allocation3 + $0xe0] sm:$0xff] %vm171, %v292
      %325 = vst.msk [vmem:[#allocation3 + $0xf0] sm:$0xff] %vm171, %v293
      %326 = vst.msk [vmem:[#allocation3 + $0x100] sm:$0xff] %vm171, %v294
      %327 = vst.msk [vmem:[#allocation3 + $0x110] sm:$0xff] %vm171, %v295
      %328 = vst.msk [vmem:[#allocation3 + $0x120] sm:$0xff] %vm171, %v296
      %329 = vst.msk [vmem:[#allocation3 + $0x130] sm:$0xff] %vm171, %v297
      %330 = vst.msk [vmem:[#allocation3 + $0x140] sm:$0xff] %vm171, %v298
      %331 = vst.msk [vmem:[#allocation3 + $0x150] sm:$0xff] %vm171, %v299
      %332 = vst.msk [vmem:[#allocation3 + $0x160] sm:$0xff] %vm171, %v300
      %333 = vst.msk [vmem:[#allocation3 + $0x170] sm:$0xff] %vm171, %v301
      %334 = vst.msk [vmem:[#allocation3 + $0x180] sm:$0xff] %vm171, %v302
      %335 = vst.msk [vmem:[#allocation3 + $0x190] sm:$0xff] %vm171, %v303
      %336 = vst.msk [vmem:[#allocation3 + $0x1a0] sm:$0xff] %vm171, %v304
      %337 = vst.msk [vmem:[#allocation3 + $0x1b0] sm:$0xff] %vm171, %v305
      %338 = vst.msk [vmem:[#allocation3 + $0x1c0] sm:$0xff] %vm171, %v306
      %339 = vst.msk [vmem:[#allocation3 + $0x1d0] sm:$0xff] %vm171, %v307
      %340 = vst.msk [vmem:[#allocation3 + $0x1e0] sm:$0xff] %vm171, %v308
      %341 = vst.msk [vmem:[#allocation3 + $0x1f0] sm:$0xff] %vm171, %v309
      %v342 = vld [vmem:[#allocation2 + $0x1] sm:$0xff]
      %v343 = vld [vmem:[#allocation2 + $0x9] sm:$0xff]
      %v344 = vld [vmem:[#allocation2 + $0x19] sm:$0xff]
      %v345 = vld [vmem:[#allocation2 + $0x21] sm:$0xff]
      %v346 = vld [vmem:[#allocation2 + $0x31] sm:$0xff]
      %v347 = vld [vmem:[#allocation2 + $0x39] sm:$0xff]
      %v348 = vld [vmem:[#allocation2 + $0x49] sm:$0xff]
      %v349 = vld [vmem:[#allocation2 + $0x51] sm:$0xff]
      %v350 = vld [vmem:[#allocation2 + $0x61] sm:$0xff]
      %v351 = vld [vmem:[#allocation2 + $0x69] sm:$0xff]
      %v352 = vld [vmem:[#allocation2 + $0x79] sm:$0xff]
      %v353 = vld [vmem:[#allocation2 + $0x81] sm:$0xff]
      %v354 = vld [vmem:[#allocation2 + $0x91] sm:$0xff]
      %v355 = vld [vmem:[#allocation2 + $0x99] sm:$0xff]
      %v356 = vld [vmem:[#allocation2 + $0xa9] sm:$0xff]
      %v357 = vld [vmem:[#allocation2 + $0xb1] sm:$0xff]
      %v358 = vld [vmem:[#allocation2 + $0xc1] sm:$0xff]
      %v359 = vld [vmem:[#allocation2 + $0xc9] sm:$0xff]
      %v360 = vld [vmem:[#allocation2 + $0xd9] sm:$0xff]
      %v361 = vld [vmem:[#allocation2 + $0xe1] sm:$0xff]
      %v362 = vld [vmem:[#allocation2 + $0xf1] sm:$0xff]
      %v363 = vld [vmem:[#allocation2 + $0xf9] sm:$0xff]
      %v364 = vld [vmem:[#allocation2 + $0x109] sm:$0xff]
      %v365 = vld [vmem:[#allocation2 + $0x111] sm:$0xff]
      %v366 = vld [vmem:[#allocation2 + $0x121] sm:$0xff]
      %v367 = vld [vmem:[#allocation2 + $0x129] sm:$0xff]
      %v368 = vld [vmem:[#allocation2 + $0x139] sm:$0xff]
      %v369 = vld [vmem:[#allocation2 + $0x141] sm:$0xff]
      %v370 = vld [vmem:[#allocation2 + $0x151] sm:$0xff]
      %v371 = vld [vmem:[#allocation2 + $0x159] sm:$0xff]
      %v372 = vld [vmem:[#allocation2 + $0x169] sm:$0xff]
      %v373 = vld [vmem:[#allocation2 + $0x171] sm:$0xff]
      %406 = vrot.lane.b32.xlu0 %v342, 16
      %v407 = vpop.permute.xlu0 %406
      %408 = vrot.lane.b32.xlu0 %v343, 16
      %v409 = vpop.permute.xlu0 %408
      %410 = vrot.lane.b32.xlu0 %v344, 16
      %v411 = vpop.permute.xlu0 %410
      %412 = vrot.lane.b32.xlu0 %v345, 16
      %v413 = vpop.permute.xlu0 %412
      %414 = vrot.lane.b32.xlu0 %v346, 16
      %v415 = vpop.permute.xlu0 %414
      %416 = vrot.lane.b32.xlu0 %v347, 16
      %v417 = vpop.permute.xlu0 %416
      %418 = vrot.lane.b32.xlu0 %v348, 16
      %v419 = vpop.permute.xlu0 %418
      %420 = vrot.lane.b32.xlu0 %v349, 16
      %v421 = vpop.permute.xlu0 %420
      %422 = vrot.lane.b32.xlu0 %v350, 16
      %v423 = vpop.permute.xlu0 %422
      %424 = vrot.lane.b32.xlu0 %v351, 16
      %v425 = vpop.permute.xlu0 %424
      %426 = vrot.lane.b32.xlu0 %v352, 16
      %v427 = vpop.permute.xlu0 %426
      %428 = vrot.lane.b32.xlu0 %v353, 16
      %v429 = vpop.permute.xlu0 %428
      %430 = vrot.lane.b32.xlu0 %v354, 16
      %v431 = vpop.permute.xlu0 %430
      %432 = vrot.lane.b32.xlu0 %v355, 16
      %v433 = vpop.permute.xlu0 %432
      %434 = vrot.lane.b32.xlu0 %v356, 16
      %v435 = vpop.permute.xlu0 %434
      %436 = vrot.lane.b32.xlu0 %v357, 16
      %v437 = vpop.permute.xlu0 %436
      %438 = vrot.lane.b32.xlu0 %v358, 16
      %v439 = vpop.permute.xlu0 %438
      %440 = vrot.lane.b32.xlu0 %v359, 16
      %v441 = vpop.permute.xlu0 %440
      %442 = vrot.lane.b32.xlu0 %v360, 16
      %v443 = vpop.permute.xlu0 %442
      %444 = vrot.lane.b32.xlu0 %v361, 16
      %v445 = vpop.permute.xlu0 %444
      %446 = vrot.lane.b32.xlu0 %v362, 16
      %v447 = vpop.permute.xlu0 %446
      %448 = vrot.lane.b32.xlu0 %v363, 16
      %v449 = vpop.permute.xlu0 %448
      %450 = vrot.lane.b32.xlu0 %v364, 16
      %v451 = vpop.permute.xlu0 %450
      %452 = vrot.lane.b32.xlu0 %v365, 16
      %v453 = vpop.permute.xlu0 %452
      %454 = vrot.lane.b32.xlu0 %v366, 16
      %v455 = vpop.permute.xlu0 %454
      %456 = vrot.lane.b32.xlu0 %v367, 16
      %v457 = vpop.permute.xlu0 %456
      %458 = vrot.lane.b32.xlu0 %v368, 16
      %v459 = vpop.permute.xlu0 %458
      %460 = vrot.lane.b32.xlu0 %v369, 16
      %v461 = vpop.permute.xlu0 %460
      %462 = vrot.lane.b32.xlu0 %v370, 16
      %v463 = vpop.permute.xlu0 %462
      %464 = vrot.lane.b32.xlu0 %v371, 16
      %v465 = vpop.permute.xlu0 %464
      %466 = vrot.lane.b32.xlu0 %v372, 16
      %v467 = vpop.permute.xlu0 %466
      %468 = vrot.lane.b32.xlu0 %v373, 16
      %v469 = vpop.permute.xlu0 %468
      %vm502 = vcmask 261248
      %503 = vst.msk [vmem:[#allocation3] sm:$0xff] %vm502, %v407
      %504 = vst.msk [vmem:[#allocation3 + $0x10] sm:$0xff] %vm502, %v409
      %505 = vst.msk [vmem:[#allocation3 + $0x20] sm:$0xff] %vm502, %v411
      %506 = vst.msk [vmem:[#allocation3 + $0x30] sm:$0xff] %vm502, %v413
      %507 = vst.msk [vmem:[#allocation3 + $0x40] sm:$0xff] %vm502, %v415
      %508 = vst.msk [vmem:[#allocation3 + $0x50] sm:$0xff] %vm502, %v417
      %509 = vst.msk [vmem:[#allocation3 + $0x60] sm:$0xff] %vm502, %v419
      %510 = vst.msk [vmem:[#allocation3 + $0x70] sm:$0xff] %vm502, %v421
      %511 = vst.msk [vmem:[#allocation3 + $0x80] sm:$0xff] %vm502, %v423
      %512 = vst.msk [vmem:[#allocation3 + $0x90] sm:$0xff] %vm502, %v425
      %513 = vst.msk [vmem:[#allocation3 + $0xa0] sm:$0xff] %vm502, %v427
      %514 = vst.msk [vmem:[#allocation3 + $0xb0] sm:$0xff] %vm502, %v429
      %515 = vst.msk [vmem:[#allocation3 + $0xc0] sm:$0xff] %vm502, %v431
      %516 = vst.msk [vmem:[#allocation3 + $0xd0] sm:$0xff] %vm502, %v433
      %517 = vst.msk [vmem:[#allocation3 + $0xe0] sm:$0xff] %vm502, %v435
      %518 = vst.msk [vmem:[#allocation3 + $0xf0] sm:$0xff] %vm502, %v437
      %519 = vst.msk [vmem:[#allocation3 + $0x100] sm:$0xff] %vm502, %v439
      %520 = vst.msk [vmem:[#allocation3 + $0x110] sm:$0xff] %vm502, %v441
      %521 = vst.msk [vmem:[#allocation3 + $0x120] sm:$0xff] %vm502, %v443
      %522 = vst.msk [vmem:[#allocation3 + $0x130] sm:$0xff] %vm502, %v445
      %523 = vst.msk [vmem:[#allocation3 + $0x140] sm:$0xff] %vm502, %v447
      %524 = vst.msk [vmem:[#allocation3 + $0x150] sm:$0xff] %vm502, %v449
      %525 = vst.msk [vmem:[#allocation3 + $0x160] sm:$0xff] %vm502, %v451
      %526 = vst.msk [vmem:[#allocation3 + $0x170] sm:$0xff] %vm502, %v453
      %527 = vst.msk [vmem:[#allocation3 + $0x180] sm:$0xff] %vm502, %v455
      %528 = vst.msk [vmem:[#allocation3 + $0x190] sm:$0xff] %vm502, %v457
      %529 = vst.msk [vmem:[#allocation3 + $0x1a0] sm:$0xff] %vm502, %v459
      %530 = vst.msk [vmem:[#allocation3 + $0x1b0] sm:$0xff] %vm502, %v461
      %531 = vst.msk [vmem:[#allocation3 + $0x1c0] sm:$0xff] %vm502, %v463
      %532 = vst.msk [vmem:[#allocation3 + $0x1d0] sm:$0xff] %vm502, %v465
      %533 = vst.msk [vmem:[#allocation3 + $0x1e0] sm:$0xff] %vm502, %v467
      %534 = vst.msk [vmem:[#allocation3 + $0x1f0] sm:$0xff] %vm502, %v469
      %v535 = vld [vmem:[#allocation2 + $0x2] sm:$0xff]
      %v536 = vld [vmem:[#allocation2 + $0xa] sm:$0xff]
      %v537 = vld [vmem:[#allocation2 + $0x1a] sm:$0xff]
      %v538 = vld [vmem:[#allocation2 + $0x22] sm:$0xff]
      %v539 = vld [vmem:[#allocation2 + $0x32] sm:$0xff]
      %v540 = vld [vmem:[#allocation2 + $0x3a] sm:$0xff]
      %v541 = vld [vmem:[#allocation2 + $0x4a] sm:$0xff]
      %v542 = vld [vmem:[#allocation2 + $0x52] sm:$0xff]
      %v543 = vld [vmem:[#allocation2 + $0x62] sm:$0xff]
      %v544 = vld [vmem:[#allocation2 + $0x6a] sm:$0xff]
      %v545 = vld [vmem:[#allocation2 + $0x7a] sm:$0xff]
      %v546 = vld [vmem:[#allocation2 + $0x82] sm:$0xff]
      %v547 = vld [vmem:[#allocation2 + $0x92] sm:$0xff]
      %v548 = vld [vmem:[#allocation2 + $0x9a] sm:$0xff]
      %v549 = vld [vmem:[#allocation2 + $0xaa] sm:$0xff]
      %v550 = vld [vmem:[#allocation2 + $0xb2] sm:$0xff]
      %v551 = vld [vmem:[#allocation2 + $0xc2] sm:$0xff]
      %v552 = vld [vmem:[#allocation2 + $0xca] sm:$0xff]
      %v553 = vld [vmem:[#allocation2 + $0xda] sm:$0xff]
      %v554 = vld [vmem:[#allocation2 + $0xe2] sm:$0xff]
      %v555 = vld [vmem:[#allocation2 + $0xf2] sm:$0xff]
      %v556 = vld [vmem:[#allocation2 + $0xfa] sm:$0xff]
      %v557 = vld [vmem:[#allocation2 + $0x10a] sm:$0xff]
      %v558 = vld [vmem:[#allocation2 + $0x112] sm:$0xff]
      %v559 = vld [vmem:[#allocation2 + $0x122] sm:$0xff]
      %v560 = vld [vmem:[#allocation2 + $0x12a] sm:$0xff]
      %v561 = vld [vmem:[#allocation2 + $0x13a] sm:$0xff]
      %v562 = vld [vmem:[#allocation2 + $0x142] sm:$0xff]
      %v563 = vld [vmem:[#allocation2 + $0x152] sm:$0xff]
      %v564 = vld [vmem:[#allocation2 + $0x15a] sm:$0xff]
      %v565 = vld [vmem:[#allocation2 + $0x16a] sm:$0xff]
      %v566 = vld [vmem:[#allocation2 + $0x172] sm:$0xff]
      %599 = vrot.lane.b32.xlu0 %v535, 32
      %v600 = vpop.permute.xlu0 %599
      %601 = vrot.lane.b32.xlu0 %v536, 32
      %v602 = vpop.permute.xlu0 %601
      %603 = vrot.lane.b32.xlu0 %v537, 32
      %v604 = vpop.permute.xlu0 %603
      %605 = vrot.lane.b32.xlu0 %v538, 32
      %v606 = vpop.permute.xlu0 %605
      %607 = vrot.lane.b32.xlu0 %v539, 32
      %v608 = vpop.permute.xlu0 %607
      %609 = vrot.lane.b32.xlu0 %v540, 32
      %v610 = vpop.permute.xlu0 %609
      %611 = vrot.lane.b32.xlu0 %v541, 32
      %v612 = vpop.permute.xlu0 %611
      %613 = vrot.lane.b32.xlu0 %v542, 32
      %v614 = vpop.permute.xlu0 %613
      %615 = vrot.lane.b32.xlu0 %v543, 32
      %v616 = vpop.permute.xlu0 %615
      %617 = vrot.lane.b32.xlu0 %v544, 32
      %v618 = vpop.permute.xlu0 %617
      %619 = vrot.lane.b32.xlu0 %v545, 32
      %v620 = vpop.permute.xlu0 %619
      %621 = vrot.lane.b32.xlu0 %v546, 32
      %v622 = vpop.permute.xlu0 %621
      %623 = vrot.lane.b32.xlu0 %v547, 32
      %v624 = vpop.permute.xlu0 %623
      %625 = vrot.lane.b32.xlu0 %v548, 32
      %v626 = vpop.permute.xlu0 %625
      %627 = vrot.lane.b32.xlu0 %v549, 32
      %v628 = vpop.permute.xlu0 %627
      %629 = vrot.lane.b32.xlu0 %v550, 32
      %v630 = vpop.permute.xlu0 %629
      %631 = vrot.lane.b32.xlu0 %v551, 32
      %v632 = vpop.permute.xlu0 %631
      %633 = vrot.lane.b32.xlu0 %v552, 32
      %v634 = vpop.permute.xlu0 %633
      %635 = vrot.lane.b32.xlu0 %v553, 32
      %v636 = vpop.permute.xlu0 %635
      %637 = vrot.lane.b32.xlu0 %v554, 32
      %v638 = vpop.permute.xlu0 %637
      %639 = vrot.lane.b32.xlu0 %v555, 32
      %v640 = vpop.permute.xlu0 %639
      %641 = vrot.lane.b32.xlu0 %v556, 32
      %v642 = vpop.permute.xlu0 %641
      %643 = vrot.lane.b32.xlu0 %v557, 32
      %v644 = vpop.permute.xlu0 %643
      %645 = vrot.lane.b32.xlu0 %v558, 32
      %v646 = vpop.permute.xlu0 %645
      %647 = vrot.lane.b32.xlu0 %v559, 32
      %v648 = vpop.permute.xlu0 %647
      %649 = vrot.lane.b32.xlu0 %v560, 32
      %v650 = vpop.permute.xlu0 %649
      %651 = vrot.lane.b32.xlu0 %v561, 32
      %v652 = vpop.permute.xlu0 %651
      %653 = vrot.lane.b32.xlu0 %v562, 32
      %v654 = vpop.permute.xlu0 %653
      %655 = vrot.lane.b32.xlu0 %v563, 32
      %v656 = vpop.permute.xlu0 %655
      %657 = vrot.lane.b32.xlu0 %v564, 32
      %v658 = vpop.permute.xlu0 %657
      %659 = vrot.lane.b32.xlu0 %v565, 32
      %v660 = vpop.permute.xlu0 %659
      %661 = vrot.lane.b32.xlu0 %v566, 32
      %v662 = vpop.permute.xlu0 %661
      %vm695 = vcmask 392448
      %696 = vst.msk [vmem:[#allocation3] sm:$0xff] %vm695, %v600
      %697 = vst.msk [vmem:[#allocation3 + $0x10] sm:$0xff] %vm695, %v602
      %698 = vst.msk [vmem:[#allocation3 + $0x20] sm:$0xff] %vm695, %v604
      %699 = vst.msk [vmem:[#allocation3 + $0x30] sm:$0xff] %vm695, %v606
      %700 = vst.msk [vmem:[#allocation3 + $0x40] sm:$0xff] %vm695, %v608
      %701 = vst.msk [vmem:[#allocation3 + $0x50] sm:$0xff] %vm695, %v610
      %702 = vst.msk [vmem:[#allocation3 + $0x60] sm:$0xff] %vm695, %v612
      %703 = vst.msk [vmem:[#allocation3 + $0x70] sm:$0xff] %vm695, %v614
      %704 = vst.msk [vmem:[#allocation3 + $0x80] sm:$0xff] %vm695, %v616
      %705 = vst.msk [vmem:[#allocation3 + $0x90] sm:$0xff] %vm695, %v618
      %706 = vst.msk [vmem:[#allocation3 + $0xa0] sm:$0xff] %vm695, %v620
      %707 = vst.msk [vmem:[#allocation3 + $0xb0] sm:$0xff] %vm695, %v622
      %708 = vst.msk [vmem:[#allocation3 + $0xc0] sm:$0xff] %vm695, %v624
      %709 = vst.msk [vmem:[#allocation3 + $0xd0] sm:$0xff] %vm695, %v626
      %710 = vst.msk [vmem:[#allocation3 + $0xe0] sm:$0xff] %vm695, %v628
      %711 = vst.msk [vmem:[#allocation3 + $0xf0] sm:$0xff] %vm695, %v630
      %712 = vst.msk [vmem:[#allocation3 + $0x100] sm:$0xff] %vm695, %v632
      %713 = vst.msk [vmem:[#allocation3 + $0x110] sm:$0xff] %vm695, %v634
      %714 = vst.msk [vmem:[#allocation3 + $0x120] sm:$0xff] %vm695, %v636
      %715 = vst.msk [vmem:[#allocation3 + $0x130] sm:$0xff] %vm695, %v638
      %716 = vst.msk [vmem:[#allocation3 + $0x140] sm:$0xff] %vm695, %v640
      %717 = vst.msk [vmem:[#allocation3 + $0x150] sm:$0xff] %vm695, %v642
      %718 = vst.msk [vmem:[#allocation3 + $0x160] sm:$0xff] %vm695, %v644
      %719 = vst.msk [vmem:[#allocation3 + $0x170] sm:$0xff] %vm695, %v646
      %720 = vst.msk [vmem:[#allocation3 + $0x180] sm:$0xff] %vm695, %v648
      %721 = vst.msk [vmem:[#allocation3 + $0x190] sm:$0xff] %vm695, %v650
      %722 = vst.msk [vmem:[#allocation3 + $0x1a0] sm:$0xff] %vm695, %v652
      %723 = vst.msk [vmem:[#allocation3 + $0x1b0] sm:$0xff] %vm695, %v654
      %724 = vst.msk [vmem:[#allocation3 + $0x1c0] sm:$0xff] %vm695, %v656
      %725 = vst.msk [vmem:[#allocation3 + $0x1d0] sm:$0xff] %vm695, %v658
      %726 = vst.msk [vmem:[#allocation3 + $0x1e0] sm:$0xff] %vm695, %v660
      %727 = vst.msk [vmem:[#allocation3 + $0x1f0] sm:$0xff] %vm695, %v662
      %v728 = vld [vmem:[%s180] sm:$0xff]
      %v729 = vld [vmem:[%s180 + $0x8] sm:$0xff]
      %v730 = vld [vmem:[%s180 + $0x18] sm:$0xff]
      %v731 = vld [vmem:[%s180 + $0x20] sm:$0xff]
      %v732 = vld [vmem:[%s180 + $0x30] sm:$0xff]
      %v733 = vld [vmem:[%s180 + $0x38] sm:$0xff]
      %v734 = vld [vmem:[%s180 + $0x48] sm:$0xff]
      %v735 = vld [vmem:[%s180 + $0x50] sm:$0xff]
      %v736 = vld [vmem:[%s180 + $0x60] sm:$0xff]
      %v737 = vld [vmem:[%s180 + $0x68] sm:$0xff]
      %v738 = vld [vmem:[%s180 + $0x78] sm:$0xff]
      %v739 = vld [vmem:[%s180 + $0x80] sm:$0xff]
      %v740 = vld [vmem:[%s180 + $0x90] sm:$0xff]
      %v741 = vld [vmem:[%s180 + $0x98] sm:$0xff]
      %v742 = vld [vmem:[%s180 + $0xa8] sm:$0xff]
      %v743 = vld [vmem:[%s180 + $0xb0] sm:$0xff]
      %v744 = vld [vmem:[%s180 + $0xc0] sm:$0xff]
      %v745 = vld [vmem:[%s180 + $0xc8] sm:$0xff]
      %v746 = vld [vmem:[%s180 + $0xd8] sm:$0xff]
      %v747 = vld [vmem:[%s180 + $0xe0] sm:$0xff]
      %v748 = vld [vmem:[%s180 + $0xf0] sm:$0xff]
      %v749 = vld [vmem:[%s180 + $0xf8] sm:$0xff]
      %v750 = vld [vmem:[%s180 + $0x108] sm:$0xff]
      %v751 = vld [vmem:[%s180 + $0x110] sm:$0xff]
      %v752 = vld [vmem:[%s180 + $0x120] sm:$0xff]
      %v753 = vld [vmem:[%s180 + $0x128] sm:$0xff]
      %v754 = vld [vmem:[%s180 + $0x138] sm:$0xff]
      %v755 = vld [vmem:[%s180 + $0x140] sm:$0xff]
      %v756 = vld [vmem:[%s180 + $0x150] sm:$0xff]
      %v757 = vld [vmem:[%s180 + $0x158] sm:$0xff]
      %v758 = vld [vmem:[%s180 + $0x168] sm:$0xff]
      %v759 = vld [vmem:[%s180 + $0x170] sm:$0xff]
      %792 = vrot.lane.b32.xlu0 %v728, 48
      %v793 = vpop.permute.xlu0 %792
      %794 = vrot.lane.b32.xlu0 %v729, 48
      %v795 = vpop.permute.xlu0 %794
      %796 = vrot.lane.b32.xlu0 %v730, 48
      %v797 = vpop.permute.xlu0 %796
      %798 = vrot.lane.b32.xlu0 %v731, 48
      %v799 = vpop.permute.xlu0 %798
      %800 = vrot.lane.b32.xlu0 %v732, 48
      %v801 = vpop.permute.xlu0 %800
      %802 = vrot.lane.b32.xlu0 %v733, 48
      %v803 = vpop.permute.xlu0 %802
      %804 = vrot.lane.b32.xlu0 %v734, 48
      %v805 = vpop.permute.xlu0 %804
      %806 = vrot.lane.b32.xlu0 %v735, 48
      %v807 = vpop.permute.xlu0 %806
      %808 = vrot.lane.b32.xlu0 %v736, 48
      %v809 = vpop.permute.xlu0 %808
      %810 = vrot.lane.b32.xlu0 %v737, 48
      %v811 = vpop.permute.xlu0 %810
      %812 = vrot.lane.b32.xlu0 %v738, 48
      %v813 = vpop.permute.xlu0 %812
      %814 = vrot.lane.b32.xlu0 %v739, 48
      %v815 = vpop.permute.xlu0 %814
      %816 = vrot.lane.b32.xlu0 %v740, 48
      %v817 = vpop.permute.xlu0 %816
      %818 = vrot.lane.b32.xlu0 %v741, 48
      %v819 = vpop.permute.xlu0 %818
      %820 = vrot.lane.b32.xlu0 %v742, 48
      %v821 = vpop.permute.xlu0 %820
      %822 = vrot.lane.b32.xlu0 %v743, 48
      %v823 = vpop.permute.xlu0 %822
      %824 = vrot.lane.b32.xlu0 %v744, 48
      %v825 = vpop.permute.xlu0 %824
      %826 = vrot.lane.b32.xlu0 %v745, 48
      %v827 = vpop.permute.xlu0 %826
      %828 = vrot.lane.b32.xlu0 %v746, 48
      %v829 = vpop.permute.xlu0 %828
      %830 = vrot.lane.b32.xlu0 %v747, 48
      %v831 = vpop.permute.xlu0 %830
      %832 = vrot.lane.b32.xlu0 %v748, 48
      %v833 = vpop.permute.xlu0 %832
      %834 = vrot.lane.b32.xlu0 %v749, 48
      %v835 = vpop.permute.xlu0 %834
      %836 = vrot.lane.b32.xlu0 %v750, 48
      %v837 = vpop.permute.xlu0 %836
      %838 = vrot.lane.b32.xlu0 %v751, 48
      %v839 = vpop.permute.xlu0 %838
      %840 = vrot.lane.b32.xlu0 %v752, 48
      %v841 = vpop.permute.xlu0 %840
      %842 = vrot.lane.b32.xlu0 %v753, 48
      %v843 = vpop.permute.xlu0 %842
      %844 = vrot.lane.b32.xlu0 %v754, 48
      %v845 = vpop.permute.xlu0 %844
      %846 = vrot.lane.b32.xlu0 %v755, 48
      %v847 = vpop.permute.xlu0 %846
      %848 = vrot.lane.b32.xlu0 %v756, 48
      %v849 = vpop.permute.xlu0 %848
      %850 = vrot.lane.b32.xlu0 %v757, 48
      %v851 = vpop.permute.xlu0 %850
      %852 = vrot.lane.b32.xlu0 %v758, 48
      %v853 = vpop.permute.xlu0 %852
      %854 = vrot.lane.b32.xlu0 %v759, 48
      %v855 = vpop.permute.xlu0 %854
      %vm888 = vcmask 523648
      %889 = vst.msk [vmem:[#allocation3] sm:$0xff] %vm888, %v793
      %890 = vst.msk [vmem:[#allocation3 + $0x10] sm:$0xff] %vm888, %v795
      %891 = vst.msk [vmem:[#allocation3 + $0x20] sm:$0xff] %vm888, %v797
      %892 = vst.msk [vmem:[#allocation3 + $0x30] sm:$0xff] %vm888, %v799
      %893 = vst.msk [vmem:[#allocation3 + $0x40] sm:$0xff] %vm888, %v801
      %894 = vst.msk [vmem:[#allocation3 + $0x50] sm:$0xff] %vm888, %v803
      %895 = vst.msk [vmem:[#allocation3 + $0x60] sm:$0xff] %vm888, %v805
      %896 = vst.msk [vmem:[#allocation3 + $0x70] sm:$0xff] %vm888, %v807
      %897 = vst.msk [vmem:[#allocation3 + $0x80] sm:$0xff] %vm888, %v809
      %898 = vst.msk [vmem:[#allocation3 + $0x90] sm:$0xff] %vm888, %v811
      %899 = vst.msk [vmem:[#allocation3 + $0xa0] sm:$0xff] %vm888, %v813
      %900 = vst.msk [vmem:[#allocation3 + $0xb0] sm:$0xff] %vm888, %v815
      %901 = vst.msk [vmem:[#allocation3 + $0xc0] sm:$0xff] %vm888, %v817
      %902 = vst.msk [vmem:[#allocation3 + $0xd0] sm:$0xff] %vm888, %v819
      %903 = vst.msk [vmem:[#allocation3 + $0xe0] sm:$0xff] %vm888, %v821
      %904 = vst.msk [vmem:[#allocation3 + $0xf0] sm:$0xff] %vm888, %v823
      %905 = vst.msk [vmem:[#allocation3 + $0x100] sm:$0xff] %vm888, %v825
      %906 = vst.msk [vmem:[#allocation3 + $0x110] sm:$0xff] %vm888, %v827
      %907 = vst.msk [vmem:[#allocation3 + $0x120] sm:$0xff] %vm888, %v829
      %908 = vst.msk [vmem:[#allocation3 + $0x130] sm:$0xff] %vm888, %v831
      %909 = vst.msk [vmem:[#allocation3 + $0x140] sm:$0xff] %vm888, %v833
      %910 = vst.msk [vmem:[#allocation3 + $0x150] sm:$0xff] %vm888, %v835
      %911 = vst.msk [vmem:[#allocation3 + $0x160] sm:$0xff] %vm888, %v837
      %912 = vst.msk [vmem:[#allocation3 + $0x170] sm:$0xff] %vm888, %v839
      %913 = vst.msk [vmem:[#allocation3 + $0x180] sm:$0xff] %vm888, %v841
      %914 = vst.msk [vmem:[#allocation3 + $0x190] sm:$0xff] %vm888, %v843
      %915 = vst.msk [vmem:[#allocation3 + $0x1a0] sm:$0xff] %vm888, %v845
      %916 = vst.msk [vmem:[#allocation3 + $0x1b0] sm:$0xff] %vm888, %v847
      %917 = vst.msk [vmem:[#allocation3 + $0x1c0] sm:$0xff] %vm888, %v849
      %918 = vst.msk [vmem:[#allocation3 + $0x1d0] sm:$0xff] %vm888, %v851
      %919 = vst.msk [vmem:[#allocation3 + $0x1e0] sm:$0xff] %vm888, %v853
      %920 = vst.msk [vmem:[#allocation3 + $0x1f0] sm:$0xff] %vm888, %v855
      %v921 = vld [vmem:[%s180 + $0x1] sm:$0xff]
      %v922 = vld [vmem:[%s180 + $0x9] sm:$0xff]
      %v923 = vld [vmem:[%s180 + $0x19] sm:$0xff]
      %v924 = vld [vmem:[%s180 + $0x21] sm:$0xff]
      %v925 = vld [vmem:[%s180 + $0x31] sm:$0xff]
      %v926 = vld [vmem:[%s180 + $0x39] sm:$0xff]
      %v927 = vld [vmem:[%s180 + $0x49] sm:$0xff]
      %v928 = vld [vmem:[%s180 + $0x51] sm:$0xff]
      %v929 = vld [vmem:[%s180 + $0x61] sm:$0xff]
      %v930 = vld [vmem:[%s180 + $0x69] sm:$0xff]
      %v931 = vld [vmem:[%s180 + $0x79] sm:$0xff]
      %v932 = vld [vmem:[%s180 + $0x81] sm:$0xff]
      %v933 = vld [vmem:[%s180 + $0x91] sm:$0xff]
      %v934 = vld [vmem:[%s180 + $0x99] sm:$0xff]
      %v935 = vld [vmem:[%s180 + $0xa9] sm:$0xff]
      %v936 = vld [vmem:[%s180 + $0xb1] sm:$0xff]
      %v937 = vld [vmem:[%s180 + $0xc1] sm:$0xff]
      %v938 = vld [vmem:[%s180 + $0xc9] sm:$0xff]
      %v939 = vld [vmem:[%s180 + $0xd9] sm:$0xff]
      %v940 = vld [vmem:[%s180 + $0xe1] sm:$0xff]
      %v941 = vld [vmem:[%s180 + $0xf1] sm:$0xff]
      %v942 = vld [vmem:[%s180 + $0xf9] sm:$0xff]
      %v943 = vld [vmem:[%s180 + $0x109] sm:$0xff]
      %v944 = vld [vmem:[%s180 + $0x111] sm:$0xff]
      %v945 = vld [vmem:[%s180 + $0x121] sm:$0xff]
      %v946 = vld [vmem:[%s180 + $0x129] sm:$0xff]
      %v947 = vld [vmem:[%s180 + $0x139] sm:$0xff]
      %v948 = vld [vmem:[%s180 + $0x141] sm:$0xff]
      %v949 = vld [vmem:[%s180 + $0x151] sm:$0xff]
      %v950 = vld [vmem:[%s180 + $0x159] sm:$0xff]
      %v951 = vld [vmem:[%s180 + $0x169] sm:$0xff]
      %v952 = vld [vmem:[%s180 + $0x171] sm:$0xff]
      %985 = vrot.lane.b32.xlu0 %v921, 64
      %v986 = vpop.permute.xlu0 %985
      %987 = vrot.lane.b32.xlu0 %v922, 64
      %v988 = vpop.permute.xlu0 %987
      %989 = vrot.lane.b32.xlu0 %v923, 64
      %v990 = vpop.permute.xlu0 %989
      %991 = vrot.lane.b32.xlu0 %v924, 64
      %v992 = vpop.permute.xlu0 %991
      %993 = vrot.lane.b32.xlu0 %v925, 64
      %v994 = vpop.permute.xlu0 %993
      %995 = vrot.lane.b32.xlu0 %v926, 64
      %v996 = vpop.permute.xlu0 %995
      %997 = vrot.lane.b32.xlu0 %v927, 64
      %v998 = vpop.permute.xlu0 %997
      %999 = vrot.lane.b32.xlu0 %v928, 64
      %v1000 = vpop.permute.xlu0 %999
      %1001 = vrot.lane.b32.xlu0 %v929, 64
      %v1002 = vpop.permute.xlu0 %1001
      %1003 = vrot.lane.b32.xlu0 %v930, 64
      %v1004 = vpop.permute.xlu0 %1003
      %1005 = vrot.lane.b32.xlu0 %v931, 64
      %v1006 = vpop.permute.xlu0 %1005
      %1007 = vrot.lane.b32.xlu0 %v932, 64
      %v1008 = vpop.permute.xlu0 %1007
      %1009 = vrot.lane.b32.xlu0 %v933, 64
      %v1010 = vpop.permute.xlu0 %1009
      %1011 = vrot.lane.b32.xlu0 %v934, 64
      %v1012 = vpop.permute.xlu0 %1011
      %1013 = vrot.lane.b32.xlu0 %v935, 64
      %v1014 = vpop.permute.xlu0 %1013
      %1015 = vrot.lane.b32.xlu0 %v936, 64
      %v1016 = vpop.permute.xlu0 %1015
      %1017 = vrot.lane.b32.xlu0 %v937, 64
      %v1018 = vpop.permute.xlu0 %1017
      %1019 = vrot.lane.b32.xlu0 %v938, 64
      %v1020 = vpop.permute.xlu0 %1019
      %1021 = vrot.lane.b32.xlu0 %v939, 64
      %v1022 = vpop.permute.xlu0 %1021
      %1023 = vrot.lane.b32.xlu0 %v940, 64
      %v1024 = vpop.permute.xlu0 %1023
      %1025 = vrot.lane.b32.xlu0 %v941, 64
      %v1026 = vpop.permute.xlu0 %1025
      %1027 = vrot.lane.b32.xlu0 %v942, 64
      %v1028 = vpop.permute.xlu0 %1027
      %1029 = vrot.lane.b32.xlu0 %v943, 64
      %v1030 = vpop.permute.xlu0 %1029
      %1031 = vrot.lane.b32.xlu0 %v944, 64
      %v1032 = vpop.permute.xlu0 %1031
      %1033 = vrot.lane.b32.xlu0 %v945, 64
      %v1034 = vpop.permute.xlu0 %1033
      %1035 = vrot.lane.b32.xlu0 %v946, 64
      %v1036 = vpop.permute.xlu0 %1035
      %1037 = vrot.lane.b32.xlu0 %v947, 64
      %v1038 = vpop.permute.xlu0 %1037
      %1039 = vrot.lane.b32.xlu0 %v948, 64
      %v1040 = vpop.permute.xlu0 %1039
      %1041 = vrot.lane.b32.xlu0 %v949, 64
      %v1042 = vpop.permute.xlu0 %1041
      %1043 = vrot.lane.b32.xlu0 %v950, 64
      %v1044 = vpop.permute.xlu0 %1043
      %1045 = vrot.lane.b32.xlu0 %v951, 64
      %v1046 = vpop.permute.xlu0 %1045
      %1047 = vrot.lane.b32.xlu0 %v952, 64
      %v1048 = vpop.permute.xlu0 %1047
      %vm1081 = vcmask 654848
      %1082 = vst.msk [vmem:[#allocation3] sm:$0xff] %vm1081, %v986
      %1083 = vst.msk [vmem:[#allocation3 + $0x10] sm:$0xff] %vm1081, %v988
      %1084 = vst.msk [vmem:[#allocation3 + $0x20] sm:$0xff] %vm1081, %v990
      %1085 = vst.msk [vmem:[#allocation3 + $0x30] sm:$0xff] %vm1081, %v992
      %1086 = vst.msk [vmem:[#allocation3 + $0x40] sm:$0xff] %vm1081, %v994
      %1087 = vst.msk [vmem:[#allocation3 + $0x50] sm:$0xff] %vm1081, %v996
      %1088 = vst.msk [vmem:[#allocation3 + $0x60] sm:$0xff] %vm1081, %v998
      %1089 = vst.msk [vmem:[#allocation3 + $0x70] sm:$0xff] %vm1081, %v1000
      %1090 = vst.msk [vmem:[#allocation3 + $0x80] sm:$0xff] %vm1081, %v1002
      %1091 = vst.msk [vmem:[#allocation3 + $0x90] sm:$0xff] %vm1081, %v1004
      %1092 = vst.msk [vmem:[#allocation3 + $0xa0] sm:$0xff] %vm1081, %v1006
      %1093 = vst.msk [vmem:[#allocation3 + $0xb0] sm:$0xff] %vm1081, %v1008
      %1094 = vst.msk [vmem:[#allocation3 + $0xc0] sm:$0xff] %vm1081, %v1010
      %1095 = vst.msk [vmem:[#allocation3 + $0xd0] sm:$0xff] %vm1081, %v1012
      %1096 = vst.msk [vmem:[#allocation3 + $0xe0] sm:$0xff] %vm1081, %v1014
      %1097 = vst.msk [vmem:[#allocation3 + $0xf0] sm:$0xff] %vm1081, %v1016
      %1098 = vst.msk [vmem:[#allocation3 + $0x100] sm:$0xff] %vm1081, %v1018
      %1099 = vst.msk [vmem:[#allocation3 + $0x110] sm:$0xff] %vm1081, %v1020
      %1100 = vst.msk [vmem:[#allocation3 + $0x120] sm:$0xff] %vm1081, %v1022
      %1101 = vst.msk [vmem:[#allocation3 + $0x130] sm:$0xff] %vm1081, %v1024
      %1102 = vst.msk [vmem:[#allocation3 + $0x140] sm:$0xff] %vm1081, %v1026
      %1103 = vst.msk [vmem:[#allocation3 + $0x150] sm:$0xff] %vm1081, %v1028
      %1104 = vst.msk [vmem:[#allocation3 + $0x160] sm:$0xff] %vm1081, %v1030
      %1105 = vst.msk [vmem:[#allocation3 + $0x170] sm:$0xff] %vm1081, %v1032
      %1106 = vst.msk [vmem:[#allocation3 + $0x180] sm:$0xff] %vm1081, %v1034
      %1107 = vst.msk [vmem:[#allocation3 + $0x190] sm:$0xff] %vm1081, %v1036
      %1108 = vst.msk [vmem:[#allocation3 + $0x1a0] sm:$0xff] %vm1081, %v1038
      %1109 = vst.msk [vmem:[#allocation3 + $0x1b0] sm:$0xff] %vm1081, %v1040
      %1110 = vst.msk [vmem:[#allocation3 + $0x1c0] sm:$0xff] %vm1081, %v1042
      %1111 = vst.msk [vmem:[#allocation3 + $0x1d0] sm:$0xff] %vm1081, %v1044
      %1112 = vst.msk [vmem:[#allocation3 + $0x1e0] sm:$0xff] %vm1081, %v1046
      %1113 = vst.msk [vmem:[#allocation3 + $0x1f0] sm:$0xff] %vm1081, %v1048
      %v1114 = vld [vmem:[%s180 + $0x2] sm:$0xff]
      %v1115 = vld [vmem:[%s180 + $0xa] sm:$0xff]
      %v1116 = vld [vmem:[%s180 + $0x1a] sm:$0xff]
      %v1117 = vld [vmem:[%s180 + $0x22] sm:$0xff]
      %v1118 = vld [vmem:[%s180 + $0x32] sm:$0xff]
      %v1119 = vld [vmem:[%s180 + $0x3a] sm:$0xff]
      %v1120 = vld [vmem:[%s180 + $0x4a] sm:$0xff]
      %v1121 = vld [vmem:[%s180 + $0x52] sm:$0xff]
      %v1122 = vld [vmem:[%s180 + $0x62] sm:$0xff]
      %v1123 = vld [vmem:[%s180 + $0x6a] sm:$0xff]
      %v1124 = vld [vmem:[%s180 + $0x7a] sm:$0xff]
      %v1125 = vld [vmem:[%s180 + $0x82] sm:$0xff]
      %v1126 = vld [vmem:[%s180 + $0x92] sm:$0xff]
      %v1127 = vld [vmem:[%s180 + $0x9a] sm:$0xff]
      %v1128 = vld [vmem:[%s180 + $0xaa] sm:$0xff]
      %v1129 = vld [vmem:[%s180 + $0xb2] sm:$0xff]
      %v1130 = vld [vmem:[%s180 + $0xc2] sm:$0xff]
      %v1131 = vld [vmem:[%s180 + $0xca] sm:$0xff]
      %v1132 = vld [vmem:[%s180 + $0xda] sm:$0xff]
      %v1133 = vld [vmem:[%s180 + $0xe2] sm:$0xff]
      %v1134 = vld [vmem:[%s180 + $0xf2] sm:$0xff]
      %v1135 = vld [vmem:[%s180 + $0xfa] sm:$0xff]
      %v1136 = vld [vmem:[%s180 + $0x10a] sm:$0xff]
      %v1137 = vld [vmem:[%s180 + $0x112] sm:$0xff]
      %v1138 = vld [vmem:[%s180 + $0x122] sm:$0xff]
      %v1139 = vld [vmem:[%s180 + $0x12a] sm:$0xff]
      %v1140 = vld [vmem:[%s180 + $0x13a] sm:$0xff]
      %v1141 = vld [vmem:[%s180 + $0x142] sm:$0xff]
      %v1142 = vld [vmem:[%s180 + $0x152] sm:$0xff]
      %v1143 = vld [vmem:[%s180 + $0x15a] sm:$0xff]
      %v1144 = vld [vmem:[%s180 + $0x16a] sm:$0xff]
      %v1145 = vld [vmem:[%s180 + $0x172] sm:$0xff]
      %1178 = vrot.lane.b32.xlu0 %v1114, 80
      %v1179 = vpop.permute.xlu0 %1178
      %1180 = vrot.lane.b32.xlu0 %v1115, 80
      %v1181 = vpop.permute.xlu0 %1180
      %1182 = vrot.lane.b32.xlu0 %v1116, 80
      %v1183 = vpop.permute.xlu0 %1182
      %1184 = vrot.lane.b32.xlu0 %v1117, 80
      %v1185 = vpop.permute.xlu0 %1184
      %1186 = vrot.lane.b32.xlu0 %v1118, 80
      %v1187 = vpop.permute.xlu0 %1186
      %1188 = vrot.lane.b32.xlu0 %v1119, 80
      %v1189 = vpop.permute.xlu0 %1188
      %1190 = vrot.lane.b32.xlu0 %v1120, 80
      %v1191 = vpop.permute.xlu0 %1190
      %1192 = vrot.lane.b32.xlu0 %v1121, 80
      %v1193 = vpop.permute.xlu0 %1192
      %1194 = vrot.lane.b32.xlu0 %v1122, 80
      %v1195 = vpop.permute.xlu0 %1194
      %1196 = vrot.lane.b32.xlu0 %v1123, 80
      %v1197 = vpop.permute.xlu0 %1196
      %1198 = vrot.lane.b32.xlu0 %v1124, 80
      %v1199 = vpop.permute.xlu0 %1198
      %1200 = vrot.lane.b32.xlu0 %v1125, 80
      %v1201 = vpop.permute.xlu0 %1200
      %1202 = vrot.lane.b32.xlu0 %v1126, 80
      %v1203 = vpop.permute.xlu0 %1202
      %1204 = vrot.lane.b32.xlu0 %v1127, 80
      %v1205 = vpop.permute.xlu0 %1204
      %1206 = vrot.lane.b32.xlu0 %v1128, 80
      %v1207 = vpop.permute.xlu0 %1206
      %1208 = vrot.lane.b32.xlu0 %v1129, 80
      %v1209 = vpop.permute.xlu0 %1208
      %1210 = vrot.lane.b32.xlu0 %v1130, 80
      %v1211 = vpop.permute.xlu0 %1210
      %1212 = vrot.lane.b32.xlu0 %v1131, 80
      %v1213 = vpop.permute.xlu0 %1212
      %1214 = vrot.lane.b32.xlu0 %v1132, 80
      %v1215 = vpop.permute.xlu0 %1214
      %1216 = vrot.lane.b32.xlu0 %v1133, 80
      %v1217 = vpop.permute.xlu0 %1216
      %1218 = vrot.lane.b32.xlu0 %v1134, 80
      %v1219 = vpop.permute.xlu0 %1218
      %1220 = vrot.lane.b32.xlu0 %v1135, 80
      %v1221 = vpop.permute.xlu0 %1220
      %1222 = vrot.lane.b32.xlu0 %v1136, 80
      %v1223 = vpop.permute.xlu0 %1222
      %1224 = vrot.lane.b32.xlu0 %v1137, 80
      %v1225 = vpop.permute.xlu0 %1224
      %1226 = vrot.lane.b32.xlu0 %v1138, 80
      %v1227 = vpop.permute.xlu0 %1226
      %1228 = vrot.lane.b32.xlu0 %v1139, 80
      %v1229 = vpop.permute.xlu0 %1228
      %1230 = vrot.lane.b32.xlu0 %v1140, 80
      %v1231 = vpop.permute.xlu0 %1230
      %1232 = vrot.lane.b32.xlu0 %v1141, 80
      %v1233 = vpop.permute.xlu0 %1232
      %1234 = vrot.lane.b32.xlu0 %v1142, 80
      %v1235 = vpop.permute.xlu0 %1234
      %1236 = vrot.lane.b32.xlu0 %v1143, 80
      %v1237 = vpop.permute.xlu0 %1236
      %1238 = vrot.lane.b32.xlu0 %v1144, 80
      %v1239 = vpop.permute.xlu0 %1238
      %1240 = vrot.lane.b32.xlu0 %v1145, 80
      %v1241 = vpop.permute.xlu0 %1240
      %vm1274 = vcmask 786048
      %1275 = vst.msk [vmem:[#allocation3] sm:$0xff] %vm1274, %v1179
      %1276 = vst.msk [vmem:[#allocation3 + $0x10] sm:$0xff] %vm1274, %v1181
      %1277 = vst.msk [vmem:[#allocation3 + $0x20] sm:$0xff] %vm1274, %v1183
      %1278 = vst.msk [vmem:[#allocation3 + $0x30] sm:$0xff] %vm1274, %v1185
      %1279 = vst.msk [vmem:[#allocation3 + $0x40] sm:$0xff] %vm1274, %v1187
      %1280 = vst.msk [vmem:[#allocation3 + $0x50] sm:$0xff] %vm1274, %v1189
      %1281 = vst.msk [vmem:[#allocation3 + $0x60] sm:$0xff] %vm1274, %v1191
      %1282 = vst.msk [vmem:[#allocation3 + $0x70] sm:$0xff] %vm1274, %v1193
      %1283 = vst.msk [vmem:[#allocation3 + $0x80] sm:$0xff] %vm1274, %v1195
      %1284 = vst.msk [vmem:[#allocation3 + $0x90] sm:$0xff] %vm1274, %v1197
      %1285 = vst.msk [vmem:[#allocation3 + $0xa0] sm:$0xff] %vm1274, %v1199
      %1286 = vst.msk [vmem:[#allocation3 + $0xb0] sm:$0xff] %vm1274, %v1201
      %1287 = vst.msk [vmem:[#allocation3 + $0xc0] sm:$0xff] %vm1274, %v1203
      %1288 = vst.msk [vmem:[#allocation3 + $0xd0] sm:$0xff] %vm1274, %v1205
      %1289 = vst.msk [vmem:[#allocation3 + $0xe0] sm:$0xff] %vm1274, %v1207
      %1290 = vst.msk [vmem:[#allocation3 + $0xf0] sm:$0xff] %vm1274, %v1209
      %1291 = vst.msk [vmem:[#allocation3 + $0x100] sm:$0xff] %vm1274, %v1211
      %1292 = vst.msk [vmem:[#allocation3 + $0x110] sm:$0xff] %vm1274, %v1213
      %1293 = vst.msk [vmem:[#allocation3 + $0x120] sm:$0xff] %vm1274, %v1215
      %1294 = vst.msk [vmem:[#allocation3 + $0x130] sm:$0xff] %vm1274, %v1217
      %1295 = vst.msk [vmem:[#allocation3 + $0x140] sm:$0xff] %vm1274, %v1219
      %1296 = vst.msk [vmem:[#allocation3 + $0x150] sm:$0xff] %vm1274, %v1221
      %1297 = vst.msk [vmem:[#allocation3 + $0x160] sm:$0xff] %vm1274, %v1223
      %1298 = vst.msk [vmem:[#allocation3 + $0x170] sm:$0xff] %vm1274, %v1225
      %1299 = vst.msk [vmem:[#allocation3 + $0x180] sm:$0xff] %vm1274, %v1227
      %1300 = vst.msk [vmem:[#allocation3 + $0x190] sm:$0xff] %vm1274, %v1229
      %1301 = vst.msk [vmem:[#allocation3 + $0x1a0] sm:$0xff] %vm1274, %v1231
      %1302 = vst.msk [vmem:[#allocation3 + $0x1b0] sm:$0xff] %vm1274, %v1233
      %1303 = vst.msk [vmem:[#allocation3 + $0x1c0] sm:$0xff] %vm1274, %v1235
      %1304 = vst.msk [vmem:[#allocation3 + $0x1d0] sm:$0xff] %vm1274, %v1237
      %1305 = vst.msk [vmem:[#allocation3 + $0x1e0] sm:$0xff] %vm1274, %v1239
      %1306 = vst.msk [vmem:[#allocation3 + $0x1f0] sm:$0xff] %vm1274, %v1241
      %s1307 = scalar_lea.vmem [#allocation2], 48
      %v1308 = vld [vmem:[%s1307] sm:$0xff]
      %v1309 = vld [vmem:[%s1307 + $0x8] sm:$0xff]
      %v1310 = vld [vmem:[%s1307 + $0x18] sm:$0xff]
      %v1311 = vld [vmem:[%s1307 + $0x20] sm:$0xff]
      %v1312 = vld [vmem:[%s1307 + $0x30] sm:$0xff]
      %v1313 = vld [vmem:[%s1307 + $0x38] sm:$0xff]
      %v1314 = vld [vmem:[%s1307 + $0x48] sm:$0xff]
      %v1315 = vld [vmem:[%s1307 + $0x50] sm:$0xff]
      %v1316 = vld [vmem:[%s1307 + $0x60] sm:$0xff]
      %v1317 = vld [vmem:[%s1307 + $0x68] sm:$0xff]
      %v1318 = vld [vmem:[%s1307 + $0x78] sm:$0xff]
      %v1319 = vld [vmem:[%s1307 + $0x80] sm:$0xff]
      %v1320 = vld [vmem:[%s1307 + $0x90] sm:$0xff]
      %v1321 = vld [vmem:[%s1307 + $0x98] sm:$0xff]
      %v1322 = vld [vmem:[%s1307 + $0xa8] sm:$0xff]
      %v1323 = vld [vmem:[%s1307 + $0xb0] sm:$0xff]
      %v1324 = vld [vmem:[%s1307 + $0xc0] sm:$0xff]
      %v1325 = vld [vmem:[%s1307 + $0xc8] sm:$0xff]
      %v1326 = vld [vmem:[%s1307 + $0xd8] sm:$0xff]
      %v1327 = vld [vmem:[%s1307 + $0xe0] sm:$0xff]
      %v1328 = vld [vmem:[%s1307 + $0xf0] sm:$0xff]
      %v1329 = vld [vmem:[%s1307 + $0xf8] sm:$0xff]
      %v1330 = vld [vmem:[%s1307 + $0x108] sm:$0xff]
      %v1331 = vld [vmem:[%s1307 + $0x110] sm:$0xff]
      %v1332 = vld [vmem:[%s1307 + $0x120] sm:$0xff]
      %v1333 = vld [vmem:[%s1307 + $0x128] sm:$0xff]
      %v1334 = vld [vmem:[%s1307 + $0x138] sm:$0xff]
      %v1335 = vld [vmem:[%s1307 + $0x140] sm:$0xff]
      %v1336 = vld [vmem:[%s1307 + $0x150] sm:$0xff]
      %v1337 = vld [vmem:[%s1307 + $0x158] sm:$0xff]
      %v1338 = vld [vmem:[%s1307 + $0x168] sm:$0xff]
      %v1339 = vld [vmem:[%s1307 + $0x170] sm:$0xff]
      %1372 = vrot.lane.b32.xlu0 %v1308, 96
      %v1373 = vpop.permute.xlu0 %1372
      %1374 = vrot.lane.b32.xlu0 %v1309, 96
      %v1375 = vpop.permute.xlu0 %1374
      %1376 = vrot.lane.b32.xlu0 %v1310, 96
      %v1377 = vpop.permute.xlu0 %1376
      %1378 = vrot.lane.b32.xlu0 %v1311, 96
      %v1379 = vpop.permute.xlu0 %1378
      %1380 = vrot.lane.b32.xlu0 %v1312, 96
      %v1381 = vpop.permute.xlu0 %1380
      %1382 = vrot.lane.b32.xlu0 %v1313, 96
      %v1383 = vpop.permute.xlu0 %1382
      %1384 = vrot.lane.b32.xlu0 %v1314, 96
      %v1385 = vpop.permute.xlu0 %1384
      %1386 = vrot.lane.b32.xlu0 %v1315, 96
      %v1387 = vpop.permute.xlu0 %1386
      %1388 = vrot.lane.b32.xlu0 %v1316, 96
      %v1389 = vpop.permute.xlu0 %1388
      %1390 = vrot.lane.b32.xlu0 %v1317, 96
      %v1391 = vpop.permute.xlu0 %1390
      %1392 = vrot.lane.b32.xlu0 %v1318, 96
      %v1393 = vpop.permute.xlu0 %1392
      %1394 = vrot.lane.b32.xlu0 %v1319, 96
      %v1395 = vpop.permute.xlu0 %1394
      %1396 = vrot.lane.b32.xlu0 %v1320, 96
      %v1397 = vpop.permute.xlu0 %1396
      %1398 = vrot.lane.b32.xlu0 %v1321, 96
      %v1399 = vpop.permute.xlu0 %1398
      %1400 = vrot.lane.b32.xlu0 %v1322, 96
      %v1401 = vpop.permute.xlu0 %1400
      %1402 = vrot.lane.b32.xlu0 %v1323, 96
      %v1403 = vpop.permute.xlu0 %1402
      %1404 = vrot.lane.b32.xlu0 %v1324, 96
      %v1405 = vpop.permute.xlu0 %1404
      %1406 = vrot.lane.b32.xlu0 %v1325, 96
      %v1407 = vpop.permute.xlu0 %1406
      %1408 = vrot.lane.b32.xlu0 %v1326, 96
      %v1409 = vpop.permute.xlu0 %1408
      %1410 = vrot.lane.b32.xlu0 %v1327, 96
      %v1411 = vpop.permute.xlu0 %1410
      %1412 = vrot.lane.b32.xlu0 %v1328, 96
      %v1413 = vpop.permute.xlu0 %1412
      %1414 = vrot.lane.b32.xlu0 %v1329, 96
      %v1415 = vpop.permute.xlu0 %1414
      %1416 = vrot.lane.b32.xlu0 %v1330, 96
      %v1417 = vpop.permute.xlu0 %1416
      %1418 = vrot.lane.b32.xlu0 %v1331, 96
      %v1419 = vpop.permute.xlu0 %1418
      %1420 = vrot.lane.b32.xlu0 %v1332, 96
      %v1421 = vpop.permute.xlu0 %1420
      %1422 = vrot.lane.b32.xlu0 %v1333, 96
      %v1423 = vpop.permute.xlu0 %1422
      %1424 = vrot.lane.b32.xlu0 %v1334, 96
      %v1425 = vpop.permute.xlu0 %1424
      %1426 = vrot.lane.b32.xlu0 %v1335, 96
      %v1427 = vpop.permute.xlu0 %1426
      %1428 = vrot.lane.b32.xlu0 %v1336, 96
      %v1429 = vpop.permute.xlu0 %1428
      %1430 = vrot.lane.b32.xlu0 %v1337, 96
      %v1431 = vpop.permute.xlu0 %1430
      %1432 = vrot.lane.b32.xlu0 %v1338, 96
      %v1433 = vpop.permute.xlu0 %1432
      %1434 = vrot.lane.b32.xlu0 %v1339, 96
      %v1435 = vpop.permute.xlu0 %1434
      %vm1468 = vcmask 917248
      %1469 = vst.msk [vmem:[#allocation3] sm:$0xff] %vm1468, %v1373
      %1470 = vst.msk [vmem:[#allocation3 + $0x10] sm:$0xff] %vm1468, %v1375
      %1471 = vst.msk [vmem:[#allocation3 + $0x20] sm:$0xff] %vm1468, %v1377
      %1472 = vst.msk [vmem:[#allocation3 + $0x30] sm:$0xff] %vm1468, %v1379
      %1473 = vst.msk [vmem:[#allocation3 + $0x40] sm:$0xff] %vm1468, %v1381
      %1474 = vst.msk [vmem:[#allocation3 + $0x50] sm:$0xff] %vm1468, %v1383
      %1475 = vst.msk [vmem:[#allocation3 + $0x60] sm:$0xff] %vm1468, %v1385
      %1476 = vst.msk [vmem:[#allocation3 + $0x70] sm:$0xff] %vm1468, %v1387
      %1477 = vst.msk [vmem:[#allocation3 + $0x80] sm:$0xff] %vm1468, %v1389
      %1478 = vst.msk [vmem:[#allocation3 + $0x90] sm:$0xff] %vm1468, %v1391
      %1479 = vst.msk [vmem:[#allocation3 + $0xa0] sm:$0xff] %vm1468, %v1393
      %1480 = vst.msk [vmem:[#allocation3 + $0xb0] sm:$0xff] %vm1468, %v1395
      %1481 = vst.msk [vmem:[#allocation3 + $0xc0] sm:$0xff] %vm1468, %v1397
      %1482 = vst.msk [vmem:[#allocation3 + $0xd0] sm:$0xff] %vm1468, %v1399
      %1483 = vst.msk [vmem:[#allocation3 + $0xe0] sm:$0xff] %vm1468, %v1401
      %1484 = vst.msk [vmem:[#allocation3 + $0xf0] sm:$0xff] %vm1468, %v1403
      %1485 = vst.msk [vmem:[#allocation3 + $0x100] sm:$0xff] %vm1468, %v1405
      %1486 = vst.msk [vmem:[#allocation3 + $0x110] sm:$0xff] %vm1468, %v1407
      %1487 = vst.msk [vmem:[#allocation3 + $0x120] sm:$0xff] %vm1468, %v1409
      %1488 = vst.msk [vmem:[#allocation3 + $0x130] sm:$0xff] %vm1468, %v1411
      %1489 = vst.msk [vmem:[#allocation3 + $0x140] sm:$0xff] %vm1468, %v1413
      %1490 = vst.msk [vmem:[#allocation3 + $0x150] sm:$0xff] %vm1468, %v1415
      %1491 = vst.msk [vmem:[#allocation3 + $0x160] sm:$0xff] %vm1468, %v1417
      %1492 = vst.msk [vmem:[#allocation3 + $0x170] sm:$0xff] %vm1468, %v1419
      %1493 = vst.msk [vmem:[#allocation3 + $0x180] sm:$0xff] %vm1468, %v1421
      %1494 = vst.msk [vmem:[#allocation3 + $0x190] sm:$0xff] %vm1468, %v1423
      %1495 = vst.msk [vmem:[#allocation3 + $0x1a0] sm:$0xff] %vm1468, %v1425
      %1496 = vst.msk [vmem:[#allocation3 + $0x1b0] sm:$0xff] %vm1468, %v1427
      %1497 = vst.msk [vmem:[#allocation3 + $0x1c0] sm:$0xff] %vm1468, %v1429
      %1498 = vst.msk [vmem:[#allocation3 + $0x1d0] sm:$0xff] %vm1468, %v1431
      %1499 = vst.msk [vmem:[#allocation3 + $0x1e0] sm:$0xff] %vm1468, %v1433
      %1500 = vst.msk [vmem:[#allocation3 + $0x1f0] sm:$0xff] %vm1468, %v1435
      %v1501 = vld [vmem:[%s1307 + $0x1] sm:$0xff]
      %v1502 = vld [vmem:[%s1307 + $0x9] sm:$0xff]
      %v1503 = vld [vmem:[%s1307 + $0x19] sm:$0xff]
      %v1504 = vld [vmem:[%s1307 + $0x21] sm:$0xff]
      %v1505 = vld [vmem:[%s1307 + $0x31] sm:$0xff]
      %v1506 = vld [vmem:[%s1307 + $0x39] sm:$0xff]
      %v1507 = vld [vmem:[%s1307 + $0x49] sm:$0xff]
      %v1508 = vld [vmem:[%s1307 + $0x51] sm:$0xff]
      %v1509 = vld [vmem:[%s1307 + $0x61] sm:$0xff]
      %v1510 = vld [vmem:[%s1307 + $0x69] sm:$0xff]
      %v1511 = vld [vmem:[%s1307 + $0x79] sm:$0xff]
      %v1512 = vld [vmem:[%s1307 + $0x81] sm:$0xff]
      %v1513 = vld [vmem:[%s1307 + $0x91] sm:$0xff]
      %v1514 = vld [vmem:[%s1307 + $0x99] sm:$0xff]
      %v1515 = vld [vmem:[%s1307 + $0xa9] sm:$0xff]
      %v1516 = vld [vmem:[%s1307 + $0xb1] sm:$0xff]
      %v1517 = vld [vmem:[%s1307 + $0xc1] sm:$0xff]
      %v1518 = vld [vmem:[%s1307 + $0xc9] sm:$0xff]
      %v1519 = vld [vmem:[%s1307 + $0xd9] sm:$0xff]
      %v1520 = vld [vmem:[%s1307 + $0xe1] sm:$0xff]
      %v1521 = vld [vmem:[%s1307 + $0xf1] sm:$0xff]
      %v1522 = vld [vmem:[%s1307 + $0xf9] sm:$0xff]
      %v1523 = vld [vmem:[%s1307 + $0x109] sm:$0xff]
      %v1524 = vld [vmem:[%s1307 + $0x111] sm:$0xff]
      %v1525 = vld [vmem:[%s1307 + $0x121] sm:$0xff]
      %v1526 = vld [vmem:[%s1307 + $0x129] sm:$0xff]
      %v1527 = vld [vmem:[%s1307 + $0x139] sm:$0xff]
      %v1528 = vld [vmem:[%s1307 + $0x141] sm:$0xff]
      %v1529 = vld [vmem:[%s1307 + $0x151] sm:$0xff]
      %v1530 = vld [vmem:[%s1307 + $0x159] sm:$0xff]
      %v1531 = vld [vmem:[%s1307 + $0x169] sm:$0xff]
      %v1532 = vld [vmem:[%s1307 + $0x171] sm:$0xff]
      %1565 = vrot.lane.b32.xlu0 %v1501, 112
      %v1566 = vpop.permute.xlu0 %1565
      %1567 = vrot.lane.b32.xlu0 %v1502, 112
      %v1568 = vpop.permute.xlu0 %1567
      %1569 = vrot.lane.b32.xlu0 %v1503, 112
      %v1570 = vpop.permute.xlu0 %1569
      %1571 = vrot.lane.b32.xlu0 %v1504, 112
      %v1572 = vpop.permute.xlu0 %1571
      %1573 = vrot.lane.b32.xlu0 %v1505, 112
      %v1574 = vpop.permute.xlu0 %1573
      %1575 = vrot.lane.b32.xlu0 %v1506, 112
      %v1576 = vpop.permute.xlu0 %1575
      %1577 = vrot.lane.b32.xlu0 %v1507, 112
      %v1578 = vpop.permute.xlu0 %1577
      %1579 = vrot.lane.b32.xlu0 %v1508, 112
      %v1580 = vpop.permute.xlu0 %1579
      %1581 = vrot.lane.b32.xlu0 %v1509, 112
      %v1582 = vpop.permute.xlu0 %1581
      %1583 = vrot.lane.b32.xlu0 %v1510, 112
      %v1584 = vpop.permute.xlu0 %1583
      %1585 = vrot.lane.b32.xlu0 %v1511, 112
      %v1586 = vpop.permute.xlu0 %1585
      %1587 = vrot.lane.b32.xlu0 %v1512, 112
      %v1588 = vpop.permute.xlu0 %1587
      %1589 = vrot.lane.b32.xlu0 %v1513, 112
      %v1590 = vpop.permute.xlu0 %1589
      %1591 = vrot.lane.b32.xlu0 %v1514, 112
      %v1592 = vpop.permute.xlu0 %1591
      %1593 = vrot.lane.b32.xlu0 %v1515, 112
      %v1594 = vpop.permute.xlu0 %1593
      %1595 = vrot.lane.b32.xlu0 %v1516, 112
      %v1596 = vpop.permute.xlu0 %1595
      %1597 = vrot.lane.b32.xlu0 %v1517, 112
      %v1598 = vpop.permute.xlu0 %1597
      %1599 = vrot.lane.b32.xlu0 %v1518, 112
      %v1600 = vpop.permute.xlu0 %1599
      %1601 = vrot.lane.b32.xlu0 %v1519, 112
      %v1602 = vpop.permute.xlu0 %1601
      %1603 = vrot.lane.b32.xlu0 %v1520, 112
      %v1604 = vpop.permute.xlu0 %1603
      %1605 = vrot.lane.b32.xlu0 %v1521, 112
      %v1606 = vpop.permute.xlu0 %1605
      %1607 = vrot.lane.b32.xlu0 %v1522, 112
      %v1608 = vpop.permute.xlu0 %1607
      %1609 = vrot.lane.b32.xlu0 %v1523, 112
      %v1610 = vpop.permute.xlu0 %1609
      %1611 = vrot.lane.b32.xlu0 %v1524, 112
      %v1612 = vpop.permute.xlu0 %1611
      %1613 = vrot.lane.b32.xlu0 %v1525, 112
      %v1614 = vpop.permute.xlu0 %1613
      %1615 = vrot.lane.b32.xlu0 %v1526, 112
      %v1616 = vpop.permute.xlu0 %1615
      %1617 = vrot.lane.b32.xlu0 %v1527, 112
      %v1618 = vpop.permute.xlu0 %1617
      %1619 = vrot.lane.b32.xlu0 %v1528, 112
      %v1620 = vpop.permute.xlu0 %1619
      %1621 = vrot.lane.b32.xlu0 %v1529, 112
      %v1622 = vpop.permute.xlu0 %1621
      %1623 = vrot.lane.b32.xlu0 %v1530, 112
      %v1624 = vpop.permute.xlu0 %1623
      %1625 = vrot.lane.b32.xlu0 %v1531, 112
      %v1626 = vpop.permute.xlu0 %1625
      %1627 = vrot.lane.b32.xlu0 %v1532, 112
      %v1628 = vpop.permute.xlu0 %1627
      %vm1661 = vcmask 1048448
      %1662 = vst.msk [vmem:[#allocation3] sm:$0xff] %vm1661, %v1566
      %1663 = vst.msk [vmem:[#allocation3 + $0x10] sm:$0xff] %vm1661, %v1568
      %1664 = vst.msk [vmem:[#allocation3 + $0x20] sm:$0xff] %vm1661, %v1570
      %1665 = vst.msk [vmem:[#allocation3 + $0x30] sm:$0xff] %vm1661, %v1572
      %1666 = vst.msk [vmem:[#allocation3 + $0x40] sm:$0xff] %vm1661, %v1574
      %1667 = vst.msk [vmem:[#allocation3 + $0x50] sm:$0xff] %vm1661, %v1576
      %1668 = vst.msk [vmem:[#allocation3 + $0x60] sm:$0xff] %vm1661, %v1578
      %1669 = vst.msk [vmem:[#allocation3 + $0x70] sm:$0xff] %vm1661, %v1580
      %1670 = vst.msk [vmem:[#allocation3 + $0x80] sm:$0xff] %vm1661, %v1582
      %1671 = vst.msk [vmem:[#allocation3 + $0x90] sm:$0xff] %vm1661, %v1584
      %1672 = vst.msk [vmem:[#allocation3 + $0xa0] sm:$0xff] %vm1661, %v1586
      %1673 = vst.msk [vmem:[#allocation3 + $0xb0] sm:$0xff] %vm1661, %v1588
      %1674 = vst.msk [vmem:[#allocation3 + $0xc0] sm:$0xff] %vm1661, %v1590
      %1675 = vst.msk [vmem:[#allocation3 + $0xd0] sm:$0xff] %vm1661, %v1592
      %1676 = vst.msk [vmem:[#allocation3 + $0xe0] sm:$0xff] %vm1661, %v1594
      %1677 = vst.msk [vmem:[#allocation3 + $0xf0] sm:$0xff] %vm1661, %v1596
      %1678 = vst.msk [vmem:[#allocation3 + $0x100] sm:$0xff] %vm1661, %v1598
      %1679 = vst.msk [vmem:[#allocation3 + $0x110] sm:$0xff] %vm1661, %v1600
      %1680 = vst.msk [vmem:[#allocation3 + $0x120] sm:$0xff] %vm1661, %v1602
      %1681 = vst.msk [vmem:[#allocation3 + $0x130] sm:$0xff] %vm1661, %v1604
      %1682 = vst.msk [vmem:[#allocation3 + $0x140] sm:$0xff] %vm1661, %v1606
      %1683 = vst.msk [vmem:[#allocation3 + $0x150] sm:$0xff] %vm1661, %v1608
      %1684 = vst.msk [vmem:[#allocation3 + $0x160] sm:$0xff] %vm1661, %v1610
      %1685 = vst.msk [vmem:[#allocation3 + $0x170] sm:$0xff] %vm1661, %v1612
      %1686 = vst.msk [vmem:[#allocation3 + $0x180] sm:$0xff] %vm1661, %v1614
      %1687 = vst.msk [vmem:[#allocation3 + $0x190] sm:$0xff] %vm1661, %v1616
      %1688 = vst.msk [vmem:[#allocation3 + $0x1a0] sm:$0xff] %vm1661, %v1618
      %1689 = vst.msk [vmem:[#allocation3 + $0x1b0] sm:$0xff] %vm1661, %v1620
      %1690 = vst.msk [vmem:[#allocation3 + $0x1c0] sm:$0xff] %vm1661, %v1622
      %1691 = vst.msk [vmem:[#allocation3 + $0x1d0] sm:$0xff] %vm1661, %v1624
      %1692 = vst.msk [vmem:[#allocation3 + $0x1e0] sm:$0xff] %vm1661, %v1626
      %1693 = vst.msk [vmem:[#allocation3 + $0x1f0] sm:$0xff] %vm1661, %v1628
      %v1694 = vld [vmem:[%s1307 + $0x2] sm:$0xff]
      %v1695 = vld [vmem:[%s1307 + $0xa] sm:$0xff]
      %v1696 = vld [vmem:[%s1307 + $0x1a] sm:$0xff]
      %v1697 = vld [vmem:[%s1307 + $0x22] sm:$0xff]
      %v1698 = vld [vmem:[%s1307 + $0x32] sm:$0xff]
      %v1699 = vld [vmem:[%s1307 + $0x3a] sm:$0xff]
      %v1700 = vld [vmem:[%s1307 + $0x4a] sm:$0xff]
      %v1701 = vld [vmem:[%s1307 + $0x52] sm:$0xff]
      %v1702 = vld [vmem:[%s1307 + $0x62] sm:$0xff]
      %v1703 = vld [vmem:[%s1307 + $0x6a] sm:$0xff]
      %v1704 = vld [vmem:[%s1307 + $0x7a] sm:$0xff]
      %v1705 = vld [vmem:[%s1307 + $0x82] sm:$0xff]
      %v1706 = vld [vmem:[%s1307 + $0x92] sm:$0xff]
      %v1707 = vld [vmem:[%s1307 + $0x9a] sm:$0xff]
      %v1708 = vld [vmem:[%s1307 + $0xaa] sm:$0xff]
      %v1709 = vld [vmem:[%s1307 + $0xb2] sm:$0xff]
      %v1710 = vld [vmem:[%s1307 + $0xc2] sm:$0xff]
      %v1711 = vld [vmem:[%s1307 + $0xca] sm:$0xff]
      %v1712 = vld [vmem:[%s1307 + $0xda] sm:$0xff]
      %v1713 = vld [vmem:[%s1307 + $0xe2] sm:$0xff]
      %v1714 = vld [vmem:[%s1307 + $0xf2] sm:$0xff]
      %v1715 = vld [vmem:[%s1307 + $0xfa] sm:$0xff]
      %v1716 = vld [vmem:[%s1307 + $0x10a] sm:$0xff]
      %v1717 = vld [vmem:[%s1307 + $0x112] sm:$0xff]
      %v1718 = vld [vmem:[%s1307 + $0x122] sm:$0xff]
      %v1719 = vld [vmem:[%s1307 + $0x12a] sm:$0xff]
      %v1720 = vld [vmem:[%s1307 + $0x13a] sm:$0xff]
      %v1721 = vld [vmem:[%s1307 + $0x142] sm:$0xff]
      %v1722 = vld [vmem:[%s1307 + $0x152] sm:$0xff]
      %v1723 = vld [vmem:[%s1307 + $0x15a] sm:$0xff]
      %v1724 = vld [vmem:[%s1307 + $0x16a] sm:$0xff]
      %v1725 = vld [vmem:[%s1307 + $0x172] sm:$0xff]
      %1726 = vst.msk [vmem:[#allocation3 + $0x8] sm:$0xff] %vm171, %v1694
      %1727 = vst.msk [vmem:[#allocation3 + $0x18] sm:$0xff] %vm171, %v1695
      %1728 = vst.msk [vmem:[#allocation3 + $0x28] sm:$0xff] %vm171, %v1696
      %1729 = vst.msk [vmem:[#allocation3 + $0x38] sm:$0xff] %vm171, %v1697
      %1730 = vst.msk [vmem:[#allocation3 + $0x48] sm:$0xff] %vm171, %v1698
      %1731 = vst.msk [vmem:[#allocation3 + $0x58] sm:$0xff] %vm171, %v1699
      %1732 = vst.msk [vmem:[#allocation3 + $0x68] sm:$0xff] %vm171, %v1700
      %1733 = vst.msk [vmem:[#allocation3 + $0x78] sm:$0xff] %vm171, %v1701
      %1734 = vst.msk [vmem:[#allocation3 + $0x88] sm:$0xff] %vm171, %v1702
      %1735 = vst.msk [vmem:[#allocation3 + $0x98] sm:$0xff] %vm171, %v1703
      %1736 = vst.msk [vmem:[#allocation3 + $0xa8] sm:$0xff] %vm171, %v1704
      %1737 = vst.msk [vmem:[#allocation3 + $0xb8] sm:$0xff] %vm171, %v1705
      %1738 = vst.msk [vmem:[#allocation3 + $0xc8] sm:$0xff] %vm171, %v1706
      %1739 = vst.msk [vmem:[#allocation3 + $0xd8] sm:$0xff] %vm171, %v1707
      %1740 = vst.msk [vmem:[#allocation3 + $0xe8] sm:$0xff] %vm171, %v1708
      %1741 = vst.msk [vmem:[#allocation3 + $0xf8] sm:$0xff] %vm171, %v1709
      %1742 = vst.msk [vmem:[#allocation3 + $0x108] sm:$0xff] %vm171, %v1710
      %1743 = vst.msk [vmem:[#allocation3 + $0x118] sm:$0xff] %vm171, %v1711
      %1744 = vst.msk [vmem:[#allocation3 + $0x128] sm:$0xff] %vm171, %v1712
      %1745 = vst.msk [vmem:[#allocation3 + $0x138] sm:$0xff] %vm171, %v1713
      %1746 = vst.msk [vmem:[#allocation3 + $0x148] sm:$0xff] %vm171, %v1714
      %1747 = vst.msk [vmem:[#allocation3 + $0x158] sm:$0xff] %vm171, %v1715
      %1748 = vst.msk [vmem:[#allocation3 + $0x168] sm:$0xff] %vm171, %v1716
      %1749 = vst.msk [vmem:[#allocation3 + $0x178] sm:$0xff] %vm171, %v1717
      %1750 = vst.msk [vmem:[#allocation3 + $0x188] sm:$0xff] %vm171, %v1718
      %1751 = vst.msk [vmem:[#allocation3 + $0x198] sm:$0xff] %vm171, %v1719
      %1752 = vst.msk [vmem:[#allocation3 + $0x1a8] sm:$0xff] %vm171, %v1720
      %1753 = vst.msk [vmem:[#allocation3 + $0x1b8] sm:$0xff] %vm171, %v1721
      %1754 = vst.msk [vmem:[#allocation3 + $0x1c8] sm:$0xff] %vm171, %v1722
      %1755 = vst.msk [vmem:[#allocation3 + $0x1d8] sm:$0xff] %vm171, %v1723
      %1756 = vst.msk [vmem:[#allocation3 + $0x1e8] sm:$0xff] %vm171, %v1724
      %1757 = vst.msk [vmem:[#allocation3 + $0x1f8] sm:$0xff] %vm171, %v1725
      %v1758 = vld [vmem:[%s1] sm:$0xff]
      %v1759 = vld [vmem:[%s1 + $0x8] sm:$0xff]
      %v1760 = vld [vmem:[%s1 + $0x10] sm:$0xff]
      %v1761 = vld [vmem:[%s1 + $0x18] sm:$0xff]
      %v1762 = vld [vmem:[%s1 + $0x20] sm:$0xff]
      %v1763 = vld [vmem:[%s1 + $0x28] sm:$0xff]
      %v1764 = vld [vmem:[%s1 + $0x30] sm:$0xff]
      %v1765 = vld [vmem:[%s1 + $0x38] sm:$0xff]
      %v1766 = vld [vmem:[#allocation3] sm:$0xff]
      %v1767 = vld [vmem:[#allocation3 + $0x8] sm:$0xff]
      %v1768 = vld [vmem:[#allocation3 + $0x10] sm:$0xff]
      %v1769 = vld [vmem:[#allocation3 + $0x18] sm:$0xff]
      %v1770 = vld [vmem:[#allocation3 + $0x20] sm:$0xff]
      %v1771 = vld [vmem:[#allocation3 + $0x28] sm:$0xff]
      %v1772 = vld [vmem:[#allocation3 + $0x30] sm:$0xff]
      %v1773 = vld [vmem:[#allocation3 + $0x38] sm:$0xff]
      %v1774 = vld [vmem:[#allocation3 + $0x40] sm:$0xff]
      %v1775 = vld [vmem:[#allocation3 + $0x48] sm:$0xff]
      %v1776 = vld [vmem:[#allocation3 + $0x50] sm:$0xff]
      %v1777 = vld [vmem:[#allocation3 + $0x58] sm:$0xff]
      %v1778 = vld [vmem:[#allocation3 + $0x60] sm:$0xff]
      %v1779 = vld [vmem:[#allocation3 + $0x68] sm:$0xff]
      %v1780 = vld [vmem:[#allocation3 + $0x70] sm:$0xff]
      %v1781 = vld [vmem:[#allocation3 + $0x78] sm:$0xff]
      %v1782 = vld [vmem:[#allocation3 + $0x80] sm:$0xff]
      %v1783 = vld [vmem:[#allocation3 + $0x88] sm:$0xff]
      %v1784 = vld [vmem:[#allocation3 + $0x90] sm:$0xff]
      %v1785 = vld [vmem:[#allocation3 + $0x98] sm:$0xff]
      %v1786 = vld [vmem:[#allocation3 + $0xa0] sm:$0xff]
      %v1787 = vld [vmem:[#allocation3 + $0xa8] sm:$0xff]
      %v1788 = vld [vmem:[#allocation3 + $0xb0] sm:$0xff]
      %v1789 = vld [vmem:[#allocation3 + $0xb8] sm:$0xff]
      %v1790 = vld [vmem:[#allocation3 + $0xc0] sm:$0xff]
      %v1791 = vld [vmem:[#allocation3 + $0xc8] sm:$0xff]
      %v1792 = vld [vmem:[#allocation3 + $0xd0] sm:$0xff]
      %v1793 = vld [vmem:[#allocation3 + $0xd8] sm:$0xff]
      %v1794 = vld [vmem:[#allocation3 + $0xe0] sm:$0xff]
      %v1795 = vld [vmem:[#allocation3 + $0xe8] sm:$0xff]
      %v1796 = vld [vmem:[#allocation3 + $0xf0] sm:$0xff]
      %v1797 = vld [vmem:[#allocation3 + $0xf8] sm:$0xff]
      %v1798 = vld [vmem:[#allocation3 + $0x100] sm:$0xff]
      %v1799 = vld [vmem:[#allocation3 + $0x108] sm:$0xff]
      %v1800 = vld [vmem:[#allocation3 + $0x110] sm:$0xff]
      %v1801 = vld [vmem:[#allocation3 + $0x118] sm:$0xff]
      %v1802 = vld [vmem:[#allocation3 + $0x120] sm:$0xff]
      %v1803 = vld [vmem:[#allocation3 + $0x128] sm:$0xff]
      %v1804 = vld [vmem:[#allocation3 + $0x130] sm:$0xff]
      %v1805 = vld [vmem:[#allocation3 + $0x138] sm:$0xff]
      %v1806 = vld [vmem:[#allocation3 + $0x140] sm:$0xff]
      %v1807 = vld [vmem:[#allocation3 + $0x148] sm:$0xff]
      %v1808 = vld [vmem:[#allocation3 + $0x150] sm:$0xff]
      %v1809 = vld [vmem:[#allocation3 + $0x158] sm:$0xff]
      %v1810 = vld [vmem:[#allocation3 + $0x160] sm:$0xff]
      %v1811 = vld [vmem:[#allocation3 + $0x168] sm:$0xff]
      %v1812 = vld [vmem:[#allocation3 + $0x170] sm:$0xff]
      %v1813 = vld [vmem:[#allocation3 + $0x178] sm:$0xff]
      %v1814 = vld [vmem:[#allocation3 + $0x180] sm:$0xff]
      %v1815 = vld [vmem:[#allocation3 + $0x188] sm:$0xff]
      %v1816 = vld [vmem:[#allocation3 + $0x190] sm:$0xff]
      %v1817 = vld [vmem:[#allocation3 + $0x198] sm:$0xff]
      %v1818 = vld [vmem:[#allocation3 + $0x1a0] sm:$0xff]
      %v1819 = vld [vmem:[#allocation3 + $0x1a8] sm:$0xff]
      %v1820 = vld [vmem:[#allocation3 + $0x1b0] sm:$0xff]
      %v1821 = vld [vmem:[#allocation3 + $0x1b8] sm:$0xff]
      %v1822 = vld [vmem:[#allocation3 + $0x1c0] sm:$0xff]
      %v1823 = vld [vmem:[#allocation3 + $0x1c8] sm:$0xff]
      %v1824 = vld [vmem:[#allocation3 + $0x1d0] sm:$0xff]
      %v1825 = vld [vmem:[#allocation3 + $0x1d8] sm:$0xff]
      %v1826 = vld [vmem:[#allocation3 + $0x1e0] sm:$0xff]
      %v1827 = vld [vmem:[#allocation3 + $0x1e8] sm:$0xff]
      %v1828 = vld [vmem:[#allocation3 + $0x1f0] sm:$0xff]
      %v1829 = vld [vmem:[#allocation3 + $0x1f8] sm:$0xff]
      %v1830 = vld [vmem:[%s2] sm:$0xff]
      %v1831 = vld [vmem:[%s2 + $0x8] sm:$0xff]
      %v1832 = vld [vmem:[%s2 + $0x10] sm:$0xff]
      %v1833 = vld [vmem:[%s2 + $0x18] sm:$0xff]
      %1835 = vset.pattern.permute.xlu0 0
      %1836 = vperm.xlu0 %1835, %v1830
      %v1837 = vpop.permute.xlu0 %1836
      %1840 = vset.pattern.permute.xlu0 0
      %1841 = vperm.xlu0 %1840, %v1831
      %v1842 = vpop.permute.xlu0 %1841
      %1845 = vset.pattern.permute.xlu0 0
      %1846 = vperm.xlu0 %1845, %v1832
      %v1847 = vpop.permute.xlu0 %1846
      %1850 = vset.pattern.permute.xlu0 0
      %1851 = vperm.xlu0 %1850, %v1833
      %v1852 = vpop.permute.xlu0 %1851
      %v1855 = vsel %vm171, %v1759, 0
      %v1858 = vsel %vm171, %v1761, 0
      %v1861 = vsel %vm171, %v1763, 0
      %v1864 = vsel %vm171, %v1765, 0
      %v1867 = vsel %vm171, %v1767, 0
      %v1870 = vsel %vm171, %v1769, 0
      %v1873 = vsel %vm171, %v1771, 0
      %v1876 = vsel %vm171, %v1773, 0
      %v1879 = vsel %vm171, %v1775, 0
      %v1882 = vsel %vm171, %v1777, 0
      %v1885 = vsel %vm171, %v1779, 0
      %v1888 = vsel %vm171, %v1781, 0
      %v1891 = vsel %vm171, %v1783, 0
      %v1894 = vsel %vm171, %v1785, 0
      %v1897 = vsel %vm171, %v1787, 0
      %v1900 = vsel %vm171, %v1789, 0
      %v1903 = vsel %vm171, %v1791, 0
      %v1906 = vsel %vm171, %v1793, 0
      %v1909 = vsel %vm171, %v1795, 0
      %v1912 = vsel %vm171, %v1797, 0
      %v1915 = vsel %vm171, %v1799, 0
      %v1918 = vsel %vm171, %v1801, 0
      %v1921 = vsel %vm171, %v1803, 0
      %v1924 = vsel %vm171, %v1805, 0
      %v1927 = vsel %vm171, %v1807, 0
      %v1930 = vsel %vm171, %v1809, 0
      %v1933 = vsel %vm171, %v1811, 0
      %v1936 = vsel %vm171, %v1813, 0
      %v1939 = vsel %vm171, %v1815, 0
      %v1942 = vsel %vm171, %v1817, 0
      %v1945 = vsel %vm171, %v1819, 0
      %v1948 = vsel %vm171, %v1821, 0
      %v1951 = vsel %vm171, %v1823, 0
      %v1954 = vsel %vm171, %v1825, 0
      %v1957 = vsel %vm171, %v1827, 0
      %v1960 = vsel %vm171, %v1829, 0
      %1962 = vmatprep.subr.mxu0 %v1867
      %1963 = vmatpush1.xpose.msra.mxu0 %v1766
      %1964 = vmatprep.subr.mxu0 %v1870
      %1965 = vmatpush1.xpose.msra.mxu0 %v1768
      %1966 = vmatprep.subr.mxu0 %v1873
      %1967 = vmatpush1.xpose.msra.mxu0 %v1770
      %1968 = vmatprep.subr.mxu0 %v1876
      %1969 = vmatpush1.xpose.msra.mxu0 %v1772
      %1970 = vmatprep.subr.mxu0 %v1879
      %1971 = vmatpush1.xpose.msra.mxu0 %v1774
      %1972 = vmatprep.subr.mxu0 %v1882
      %1973 = vmatpush1.xpose.msra.mxu0 %v1776
      %1974 = vmatprep.subr.mxu0 %v1885
      %1975 = vmatpush1.xpose.msra.mxu0 %v1778
      %1976 = vmatprep.subr.mxu0 %v1888
      %1977 = vmatpush1.xpose.msra.mxu0 %v1780
      %1978 = vmatprep.subr.mxu0 %v1891
      %1979 = vmatpush1.xpose.msra.mxu0 %v1782
      %1980 = vmatprep.subr.mxu0 %v1894
      %1981 = vmatpush1.xpose.msra.mxu0 %v1784
      %1982 = vmatprep.subr.mxu0 %v1897
      %1983 = vmatpush1.xpose.msra.mxu0 %v1786
      %1984 = vmatprep.subr.mxu0 %v1900
      %1985 = vmatpush1.xpose.msra.mxu0 %v1788
      %1986 = vmatprep.subr.mxu0 %v1903
      %1987 = vmatpush1.xpose.msra.mxu0 %v1790
      %1988 = vmatprep.subr.mxu0 %v1906
      %1989 = vmatpush1.xpose.msra.mxu0 %v1792
      %1990 = vmatprep.subr.mxu0 %v1909
      %1991 = vmatpush1.xpose.msra.mxu0 %v1794
      %1992 = vmatprep.subr.mxu0 %v1912
      %1993 = vmatpush1.xpose.msra.mxu0 %v1796
      %1994 = vmatprep.subr.mxu0 %v1915
      %1995 = vmatpush1.xpose.msra.mxu0 %v1798
      %1996 = vmatprep.subr.mxu0 %v1918
      %1997 = vmatpush1.xpose.msra.mxu0 %v1800
      %1998 = vmatprep.subr.mxu0 %v1921
      %1999 = vmatpush1.xpose.msra.mxu0 %v1802
      %2000 = vmatprep.subr.mxu0 %v1924
      %2001 = vmatpush1.xpose.msra.mxu0 %v1804
      %2002 = vmatprep.subr.mxu0 %v1927
      %2003 = vmatpush1.xpose.msra.mxu0 %v1806
      %2004 = vmatprep.subr.mxu0 %v1930
      %2005 = vmatpush1.xpose.msra.mxu0 %v1808
      %2006 = vmatprep.subr.mxu0 %v1933
      %2007 = vmatpush1.xpose.msra.mxu0 %v1810
      %2008 = vmatprep.subr.mxu0 %v1936
      %2009 = vmatpush1.xpose.msra.mxu0 %v1812
      %2010 = vmatprep.subr.mxu0 %v1939
      %2011 = vmatpush1.xpose.msra.mxu0 %v1814
      %2012 = vmatprep.subr.mxu0 %v1942
      %2013 = vmatpush1.xpose.msra.mxu0 %v1816
      %2014 = vmatprep.subr.mxu0 %v1945
      %2015 = vmatpush1.xpose.msra.mxu0 %v1818
      %2016 = vmatprep.subr.mxu0 %v1948
      %2017 = vmatpush1.xpose.msra.mxu0 %v1820
      %2018 = vmatprep.subr.mxu0 %v1951
      %2019 = vmatpush1.xpose.msra.mxu0 %v1822
      %2020 = vmatprep.subr.mxu0 %v1954
      %2021 = vmatpush1.xpose.msra.mxu0 %v1824
      %2022 = vmatprep.subr.mxu0 %v1957
      %2023 = vmatpush1.xpose.msra.mxu0 %v1826
      %2024 = vmatprep.subr.mxu0 %v1960
      %2025 = vmatpush1.xpose.msra.mxu0 %v1828
      %2026 = vmatprep.mubr.f32.mxu0 %v1855
      %2027 = vmatmul.mubr.f32.gmra.mrb[0].mxu0 %v1758
      %v2028 = vpop.f32.mrb[0].mxu0
      %v2029 = vadd.f32 %v1837, %v2028
      %v2030 = vpop.f32.mrb[0].mxu0
      %v2031 = vadd.f32 %v1837, %v2030
      %2032 = vmatprep.mubr.f32.mxu0 %v1858
      %2033 = vmatmul.mubr.f32.gmra.mrb[0].mxu0 %v1760
      %v2034 = vpop.f32.mrb[0].mxu0
      %v2035 = vadd.f32 %v1842, %v2034
      %v2036 = vpop.f32.mrb[0].mxu0
      %v2037 = vadd.f32 %v1842, %v2036
      %2038 = vmatprep.mubr.f32.mxu0 %v1861
      %2039 = vmatmul.mubr.f32.gmra.mrb[0].mxu0 %v1762
      %v2040 = vpop.f32.mrb[0].mxu0
      %v2041 = vadd.f32 %v1847, %v2040
      %v2042 = vpop.f32.mrb[0].mxu0
      %v2043 = vadd.f32 %v1847, %v2042
      %2044 = vmatprep.mubr.f32.mxu0 %v1864
      %2045 = vmatmul.mubr.f32.gmra.mrb[0].mxu0 %v1764
      %v2046 = vpop.f32.mrb[0].mxu0
      %v2047 = vadd.f32 %v1852, %v2046
      %v2048 = vpop.f32.mrb[0].mxu0
      %v2049 = vadd.f32 %v1852, %v2048
      %2050 = vdwg.mxu0
      %v2051 = vmax.f32 %v2029, 0.0
      %v2052 = vmax.f32 %v2031, 0.0
      %v2053 = vmax.f32 %v2035, 0.0
      %v2054 = vmax.f32 %v2037, 0.0
      %v2055 = vmax.f32 %v2041, 0.0
      %v2056 = vmax.f32 %v2043, 0.0
      %v2057 = vmax.f32 %v2047, 0.0
      %v2058 = vmax.f32 %v2049, 0.0
      %2059 = vst [vmem:[%s170] sm:$0xff] %v2051
      %2060 = vst [vmem:[%s170 + $0x8] sm:$0xff] %v2052
      %2061 = vst [vmem:[%s170 + $0x10] sm:$0xff] %v2053
      %2062 = vst [vmem:[%s170 + $0x18] sm:$0xff] %v2054
      %2063 = vst [vmem:[%s170 + $0x20] sm:$0xff] %v2055
      %2064 = vst [vmem:[%s170 + $0x28] sm:$0xff] %v2056
      %2065 = vst [vmem:[%s170 + $0x30] sm:$0xff] %v2057
      %2066 = vst [vmem:[%s170 + $0x38] sm:$0xff] %v2058
      %p2067 = scmp.lt.s32.totalorder %s14, 1
      %s2068 = scalar_select %p2067, %s14, 1
      %s2069 = smul.addr %s2068, 8
      %s2070 = smul.addr %s2069, 8
      %s2071 = scalar_lea.vmem %s3, %s2070
      // Predicated region
      $region33: #{basic_conv_forward.1} parent=31 // pred_check
        %p2072 = pneg %p100
      $region34: #{basic_conv_forward.1} parent=31 // pred_check_branch
        %2074 = sbr.rel (%p2072) target = $region36
      $region35: #{basic_conv_forward.1} parent=31 // pred_region
        _
      $region36: #{basic_conv_forward.1} parent=31 // pred_fallthru
        _
    $region32: #{basic_conv_forward.1} parent=5 // pred_fallthru
      _
    %p2075 = scmp.le.s32.totalorder 2, %s9
    // Predicated region
    $region37: #{basic_conv_forward.1} parent=5 // pred_check
      %p2076 = pneg %p2075
    $region38: #{basic_conv_forward.1} parent=5 // pred_check_branch
      %2078 = sbr.rel (%p2076) target = $region40
    $region39: #{basic_conv_forward.1} parent=5 // pred_region
      %s2079 = ssub.s32 %s9, 2
      // Predicated region
      $region41: #{basic_conv_forward.1} parent=39 // pred_check
        %p2080 = pneg %p106
      $region42: #{basic_conv_forward.1} parent=39 // pred_check_branch
        %2082 = sbr.rel (%p2080) target = $region44
      $region43: #{basic_conv_forward.1} parent=39 // pred_region
        %p2083 = scmp.lt.s32.totalorder %s15, 1
        %s2084 = scalar_select %p2083, %s15, 1
        %s2085 = smul.addr %s2084, 8
        %s2086 = smul.addr %s2085, 8
        %s2087 = scalar_lea.vmem %s3, %s2086
      $region44: #{basic_conv_forward.1} parent=39 // pred_fallthru
        _
    $region40: #{basic_conv_forward.1} parent=5 // pred_fallthru
      _
  $region6: #{basic_conv_forward.1} parent=0 // loop_footer
    %s13 = sadd.s32 1, %s9
  $region7: #{basic_conv_forward.1} parent=0 // loop_footer_branch
    %8 = sbr.rel target = $region3
  $region8: #{basic_conv_forward.1} parent=0 // loop_exit
    _

</llo_original>
